<compile_context>
chip_gen: v5e
topology: v5e:2x2
jax: 0.10.0
libtpu: 0.0.40
codegen_flags: <defaults>
</compile_context>

<pallas_src>
import jax
import jax.numpy as jnp
from jax.experimental import pallas as pl
from jax.experimental.pallas import tpu as pltpu

SEQ = 8
BATCH = 2
HIDDEN = 32          # embed_size == hidden_size (required by the module's view() / residual)
NLAYERS = 2          # wavefront construction below assumes exactly 2 layers
INPUT_SIZE = 1
OUTPUT_SIZE = 1
EPS = 1e-6


def _layernorm(x, gamma, beta, eps=EPS):
    # Matches the custom LayerNorm: mean / std over last dim, torch .std() is
    # unbiased (divides by H-1), and eps is added to std (not variance).
    h = x.shape[-1]
    mean = jnp.mean(x, axis=-1, keepdims=True)
    var = jnp.sum((x - mean) ** 2, axis=-1, keepdims=True) / (h - 1)
    std = jnp.sqrt(var)
    inv = pl.reciprocal(std + eps, approx=False)   # exact; parity with PyTorch divide
    return gamma * (x - mean) * inv + beta


def rnn_model_kernel(x_ref, h0_ref, c0_ref,
                     enc_w_ref, enc_b_ref,
                     g1_ref, b1_ref,
                     wih1_ref, b1s_ref,
                     wbig_ref, b2s_ref,
                     g2_ref, b2_ref,
                     dec_w_ref, dec_b_ref,
                     dec_out_ref, hn_ref, cn_ref,
                     seq_scratch):
    H = HIDDEN
    B = BATCH
    S = SEQ

    # --- encoder: Linear(1, H). K=1 contraction == outer product -> VPU
    #     broadcast multiply-add instead of an MXU push.
    emb = x_ref[...] * enc_w_ref[...] + enc_b_ref[...]        # (S*B, H)
    x_res = emb                                               # residual (pre-norm emb)

    # --- norm1 (dropout is identity at inference)
    layer_in = _layernorm(emb, g1_ref[...], b1_ref[...])      # (S*B, H)

    # --- hoisted layer-1 input projection for all timesteps (bias pre-summed):
    #     one (S*B, H) x (H, 4H) matmul, off the serial chain.
    xproj1 = jnp.dot(layer_in, wih1_ref[...],
                     preferred_element_type=jnp.float32) + b1s_ref[...]   # (S*B, 4H)

    w_big = wbig_ref[...]                                     # (2H, 8H) block-structured
    b2s = b2s_ref[...]                                        # (1, 4H)  layer-2 bias sum

    h1 = h0_ref[0]
    c1 = c0_ref[0]
    h2 = h0_ref[1]
    c2 = c0_ref[1]

    def lstm_cell(gates, c_prev):
        # PyTorch gate order (i, f, g, o); sigmoid full width, tanh on g only.
        sig = jax.nn.sigmoid(gates)
        i = sig[:, 0 * H:1 * H]
        f = sig[:, 1 * H:2 * H]
        o = sig[:, 3 * H:4 * H]
        g = jnp.tanh(gates[:, 2 * H:3 * H])
        c_new = f * c_prev + i * g
        h_new = o * jnp.tanh(c_new)
        return h_new, c_new

    # --- wavefront over the two layers: at step w, layer 1 processes t = w and
    #     layer 2 processes t = w-1, sharing one (B,2H)x(2H,8H) MXU matmul.
    #     `big` is computed from the PRE-update (h1, h2), exactly what both
    #     layers need (layer-2's input at t-1 is layer-1's h at t-1).
    for w in range(S + NLAYERS - 1):                          # 9 serial steps
        h12 = jnp.concatenate([h1, h2], axis=1)               # (B, 2H)
        big = jnp.dot(h12, w_big,
                      preferred_element_type=jnp.float32)     # (B, 8H)
        # big[:, :4H]  = h1 @ W_hh1
        # big[:, 4H:]  = h1 @ W_ih2 + h2 @ W_hh2
        if w < S:                                             # layer 1 active (t = w)
            gates1 = xproj1[w * B:(w + 1) * B, :] + big[:, :4 * H]
            h1, c1 = lstm_cell(gates1, c1)
        if w >= 1:                                            # layer 2 active (t = w-1)
            gates2 = big[:, 4 * H:] + b2s
            h2, c2 = lstm_cell(gates2, c2)
            # per-step store (hides under next step's matmul), no concatenate
            seq_scratch[(w - 1) * B:w * B, :] = h2

    hn_ref[0] = h1
    cn_ref[0] = c1
    hn_ref[1] = h2
    cn_ref[1] = c2

    # --- norm2 + residual + decoder Linear(H, 1):
    #     N=1 output column -> VPU multiply + lane reduce instead of MXU matmul.
    out_seq = seq_scratch[...]                                # (S*B, H)
    out = _layernorm(out_seq, g2_ref[...], b2_ref[...]) + x_res
    dec_out_ref[...] = (jnp.sum(out * dec_w_ref[...], axis=-1, keepdims=True)
                        + dec_b_ref[...])


def rnn_model_forward(x, h0, c0, params):
    seq, batch, _ = x.shape
    assert seq == SEQ and batch == BATCH and NLAYERS == 2
    n = seq * batch
    H = HIDDEN
    x_flat = x.reshape(n, 1).astype(jnp.float32)

    # pre-sum LSTM biases on the host (b_ih + b_hh)
    b1sum = params["b_ih"][0] + params["b_hh"][0]             # (1, 4H)
    b2sum = params["b_ih"][1] + params["b_hh"][1]             # (1, 4H)

    # block-structured recurrent weight for the 2-layer wavefront:
    #   [h1, h2] @ W_big = [ h1@W_hh1 | h1@W_ih2 + h2@W_hh2 ]
    top = jnp.concatenate([params["w_hh"][0], params["w_ih"][1]], axis=1)           # (H, 8H)
    bot = jnp.concatenate([jnp.zeros((H, 4 * H), jnp.float32),
                           params["w_hh"][1]], axis=1)                              # (H, 8H)
    w_big = jnp.concatenate([top, bot], axis=0)                                     # (2H, 8H)

    vmem = pl.BlockSpec(memory_space=pltpu.MemorySpace.VMEM)
    inputs = (x_flat, h0, c0,
              params["enc_w"], params["enc_b"],
              params["g1"], params["b1"],
              params["w_ih"][0], b1sum,
              w_big, b2sum,
              params["g2"], params["b2"],
              params["dec_w"], params["dec_b"])

    decoded, hn, cn = pl.pallas_call(
        rnn_model_kernel,
        out_shape=(jax.ShapeDtypeStruct((n, OUTPUT_SIZE), jnp.float32),
                   jax.ShapeDtypeStruct((NLAYERS, BATCH, HIDDEN), jnp.float32),
                   jax.ShapeDtypeStruct((NLAYERS, BATCH, HIDDEN), jnp.float32)),
        in_specs=[vmem] * len(inputs),
        out_specs=(vmem, vmem, vmem),
        scratch_shapes=[pltpu.VMEM((SEQ * BATCH, HIDDEN), jnp.float32)],
    )(*inputs)

    return decoded.reshape(seq, batch, OUTPUT_SIZE), (hn, cn)


def make_params(key):
    H = HIDDEN
    keys = jax.random.split(key, 12)
    initrange = 0.1                       # init_weights()
    k = float(1.0 / (H ** 0.5))           # default torch LSTM / Linear init range

    def u(kk, shape, lim):
        return jax.random.uniform(kk, shape, jnp.float32, -lim, lim)

    params = {
        "enc_w": u(keys[0], (1, H), initrange),        # encoder.weight^T  (H,1) -> (1,H)
        "enc_b": u(keys[1], (1, H), 1.0),              # encoder.bias (fan_in=1)
        "g1": jnp.ones((1, H), jnp.float32),
        "b1": jnp.zeros((1, H), jnp.float32),
        "w_ih": jnp.stack([u(keys[2 + l], (H, 4 * H), k) for l in range(NLAYERS)]),
        "w_hh": jnp.stack([u(keys[4 + l], (H, 4 * H), k) for l in range(NLAYERS)]),
        "b_ih": jnp.stack([u(keys[6 + l], (1, 4 * H), k) for l in range(NLAYERS)]),
        "b_hh": jnp.stack([u(keys[8 + l], (1, 4 * H), k) for l in range(NLAYERS)]),
        "g2": jnp.ones((1, H), jnp.float32),
        "b2": jnp.zeros((1, H), jnp.float32),
        "dec_w": u(keys[10], (1, H), initrange),       # decoder.weight (1, H); used row-wise
        "dec_b": u(keys[11], (1, 1), k),
    }
    return params


if __name__ == "__main__":
    key = jax.random.PRNGKey(0)
    kx, kp = jax.random.split(key)

    x = jax.random.normal(kx, (SEQ, BATCH, INPUT_SIZE), dtype=jnp.float32)
    h0 = jnp.zeros((NLAYERS, BATCH, HIDDEN), jnp.float32)   # init_hidden(bsz)
    c0 = jnp.zeros((NLAYERS, BATCH, HIDDEN), jnp.float32)
    params = make_params(kp)

    decoded, (hn, cn) = rnn_model_forward(x, h0, c0, params)
    jax.block_until_ready((decoded, hn, cn))

    assert decoded.shape == (SEQ, BATCH, OUTPUT_SIZE)
    assert hn.shape == (NLAYERS, BATCH, HIDDEN)
    assert cn.shape == (NLAYERS, BATCH, HIDDEN)
    print("KERNEL_OK")
</pallas_src>

<mosaic_0001>
module attributes {stable_mosaic.version = 11 : i64} {
  func.func @rnn_model_kernel(%arg0: memref<16x1xf32, #tpu.memory_space<vmem>>, %arg1: memref<2x2x32xf32, #tpu.memory_space<vmem>>, %arg2: memref<2x2x32xf32, #tpu.memory_space<vmem>>, %arg3: memref<1x32xf32, #tpu.memory_space<vmem>>, %arg4: memref<1x32xf32, #tpu.memory_space<vmem>>, %arg5: memref<1x32xf32, #tpu.memory_space<vmem>>, %arg6: memref<1x32xf32, #tpu.memory_space<vmem>>, %arg7: memref<32x128xf32, #tpu.memory_space<vmem>>, %arg8: memref<1x128xf32, #tpu.memory_space<vmem>>, %arg9: memref<64x256xf32, #tpu.memory_space<vmem>>, %arg10: memref<1x128xf32, #tpu.memory_space<vmem>>, %arg11: memref<1x32xf32, #tpu.memory_space<vmem>>, %arg12: memref<1x32xf32, #tpu.memory_space<vmem>>, %arg13: memref<1x32xf32, #tpu.memory_space<vmem>>, %arg14: memref<1x1xf32, #tpu.memory_space<vmem>>, %arg15: memref<16x1xf32, #tpu.memory_space<vmem>>, %arg16: memref<2x2x32xf32, #tpu.memory_space<vmem>>, %arg17: memref<2x2x32xf32, #tpu.memory_space<vmem>>, %arg18: memref<16x32xf32, #tpu.memory_space<vmem>>) attributes {dimension_semantics = [], scalar_prefetch = 0 : i64, scratch_operands = 1 : i64, tpu.core_type = #tpu.core_type<tc>} {
    %c0 = arith.constant 0 : index
    %c0_0 = arith.constant 0 : index
    %0 = vector.load %arg0[%c0, %c0_0] : memref<16x1xf32, #tpu.memory_space<vmem>>, vector<16x1xf32>
    %c0_1 = arith.constant 0 : index
    %c0_2 = arith.constant 0 : index
    %1 = vector.load %arg3[%c0_1, %c0_2] : memref<1x32xf32, #tpu.memory_space<vmem>>, vector<1x32xf32>
    %2 = vector.broadcast %0 : vector<16x1xf32> to vector<16x32xf32>
    %3 = vector.broadcast %1 : vector<1x32xf32> to vector<16x32xf32>
    %4 = arith.mulf %2, %3 : vector<16x32xf32>
    %c0_3 = arith.constant 0 : index
    %c0_4 = arith.constant 0 : index
    %5 = vector.load %arg4[%c0_3, %c0_4] : memref<1x32xf32, #tpu.memory_space<vmem>>, vector<1x32xf32>
    %6 = vector.broadcast %5 : vector<1x32xf32> to vector<16x32xf32>
    %7 = arith.addf %4, %6 : vector<16x32xf32>
    %c0_5 = arith.constant 0 : index
    %c0_6 = arith.constant 0 : index
    %8 = vector.load %arg5[%c0_5, %c0_6] : memref<1x32xf32, #tpu.memory_space<vmem>>, vector<1x32xf32>
    %c0_7 = arith.constant 0 : index
    %c0_8 = arith.constant 0 : index
    %9 = vector.load %arg6[%c0_7, %c0_8] : memref<1x32xf32, #tpu.memory_space<vmem>>, vector<1x32xf32>
    %cst = arith.constant dense<0.000000e+00> : vector<16xf32>
    %10 = vector.multi_reduction <add>, %7, %cst [1] : vector<16x32xf32> to vector<16xf32>
    %11 = vector.shape_cast %10 : vector<16xf32> to vector<16x1xf32>
    %cst_9 = arith.constant 3.200000e+01 : f32
    %12 = vector.broadcast %cst_9 : f32 to vector<16x1xf32>
    %13 = arith.divf %11, %12 : vector<16x1xf32>
    %14 = vector.broadcast %13 : vector<16x1xf32> to vector<16x32xf32>
    %15 = arith.subf %7, %14 : vector<16x32xf32>
    %16 = arith.mulf %15, %15 : vector<16x32xf32>
    %cst_10 = arith.constant dense<0.000000e+00> : vector<16xf32>
    %17 = vector.multi_reduction <add>, %16, %cst_10 [1] : vector<16x32xf32> to vector<16xf32>
    %18 = vector.shape_cast %17 : vector<16xf32> to vector<16x1xf32>
    %cst_11 = arith.constant 3.100000e+01 : f32
    %19 = vector.broadcast %cst_11 : f32 to vector<16x1xf32>
    %20 = arith.divf %18, %19 : vector<16x1xf32>
    %21 = math.sqrt %20 : vector<16x1xf32>
    %cst_12 = arith.constant 9.99999997E-7 : f32
    %22 = vector.broadcast %cst_12 : f32 to vector<16x1xf32>
    %23 = arith.addf %21, %22 : vector<16x1xf32>
    %24 = tpu.reciprocal %23 : vector<16x1xf32> -> vector<16x1xf32>
    %25 = vector.broadcast %13 : vector<16x1xf32> to vector<16x32xf32>
    %26 = arith.subf %7, %25 : vector<16x32xf32>
    %27 = vector.broadcast %8 : vector<1x32xf32> to vector<16x32xf32>
    %28 = arith.mulf %27, %26 : vector<16x32xf32>
    %29 = vector.broadcast %24 : vector<16x1xf32> to vector<16x32xf32>
    %30 = arith.mulf %28, %29 : vector<16x32xf32>
    %31 = vector.broadcast %9 : vector<1x32xf32> to vector<16x32xf32>
    %32 = arith.addf %30, %31 : vector<16x32xf32>
    %c0_13 = arith.constant 0 : index
    %c0_14 = arith.constant 0 : index
    %33 = vector.load %arg7[%c0_13, %c0_14] : memref<32x128xf32, #tpu.memory_space<vmem>>, vector<32x128xf32>
    %cst_15 = arith.constant dense<0.000000e+00> : vector<16x128xf32>
    %34 = tpu.matmul %32, %33, %cst_15 {dimension_numbers = #tpu.dot_dimension_numbers<[1], [0], [0], [1], [0, 0, 1, 1], [], []>} : vector<16x32xf32>, vector<32x128xf32>, vector<16x128xf32> -> vector<16x128xf32>
    %c0_16 = arith.constant 0 : index
    %c0_17 = arith.constant 0 : index
    %35 = vector.load %arg8[%c0_16, %c0_17] : memref<1x128xf32, #tpu.memory_space<vmem>>, vector<1x128xf32>
    %36 = vector.broadcast %35 : vector<1x128xf32> to vector<16x128xf32>
    %37 = arith.addf %34, %36 : vector<16x128xf32>
    %c0_18 = arith.constant 0 : index
    %c0_19 = arith.constant 0 : index
    %38 = vector.load %arg9[%c0_18, %c0_19] : memref<64x256xf32, #tpu.memory_space<vmem>>, vector<64x256xf32>
    %c0_20 = arith.constant 0 : index
    %c0_21 = arith.constant 0 : index
    %39 = vector.load %arg10[%c0_20, %c0_21] : memref<1x128xf32, #tpu.memory_space<vmem>>, vector<1x128xf32>
    %c0_22 = arith.constant 0 : index
    %c0_23 = arith.constant 0 : index
    %c0_24 = arith.constant 0 : index
    %40 = vector.load %arg1[%c0_22, %c0_23, %c0_24] : memref<2x2x32xf32, #tpu.memory_space<vmem>>, vector<1x2x32xf32>
    %41 = vector.shape_cast %40 : vector<1x2x32xf32> to vector<2x32xf32>
    %c0_25 = arith.constant 0 : index
    %c0_26 = arith.constant 0 : index
    %c0_27 = arith.constant 0 : index
    %42 = vector.load %arg2[%c0_25, %c0_26, %c0_27] : memref<2x2x32xf32, #tpu.memory_space<vmem>>, vector<1x2x32xf32>
    %43 = vector.shape_cast %42 : vector<1x2x32xf32> to vector<2x32xf32>
    %c1 = arith.constant 1 : index
    %c0_28 = arith.constant 0 : index
    %c0_29 = arith.constant 0 : index
    %44 = vector.load %arg1[%c1, %c0_28, %c0_29] : memref<2x2x32xf32, #tpu.memory_space<vmem>>, vector<1x2x32xf32>
    %45 = vector.shape_cast %44 : vector<1x2x32xf32> to vector<2x32xf32>
    %c1_30 = arith.constant 1 : index
    %c0_31 = arith.constant 0 : index
    %c0_32 = arith.constant 0 : index
    %46 = vector.load %arg2[%c1_30, %c0_31, %c0_32] : memref<2x2x32xf32, #tpu.memory_space<vmem>>, vector<1x2x32xf32>
    %47 = vector.shape_cast %46 : vector<1x2x32xf32> to vector<2x32xf32>
    %48 = tpu.concatenate %41, %45 in 1 : vector<2x32xf32>, vector<2x32xf32> -> vector<2x64xf32>
    %cst_33 = arith.constant dense<0.000000e+00> : vector<2x256xf32>
    %49 = tpu.matmul %48, %38, %cst_33 {dimension_numbers = #tpu.dot_dimension_numbers<[1], [0], [0], [1], [0, 0, 1, 1], [], []>} : vector<2x64xf32>, vector<64x256xf32>, vector<2x256xf32> -> vector<2x256xf32>
    %50 = vector.extract_strided_slice %37 {offsets = [0, 0], sizes = [2, 128], strides = [1, 1]} : vector<16x128xf32> to vector<2x128xf32>
    %51 = vector.extract_strided_slice %49 {offsets = [0, 0], sizes = [2, 128], strides = [1, 1]} : vector<2x256xf32> to vector<2x128xf32>
    %52 = arith.addf %50, %51 : vector<2x128xf32>
    %53 = arith.negf %52 : vector<2x128xf32>
    %54 = math.exp %53 : vector<2x128xf32>
    %cst_34 = arith.constant 1.000000e+00 : f32
    %55 = vector.broadcast %cst_34 : f32 to vector<2x128xf32>
    %56 = arith.addf %55, %54 : vector<2x128xf32>
    %57 = arith.divf %55, %56 : vector<2x128xf32>
    %58 = vector.extract_strided_slice %57 {offsets = [0, 0], sizes = [2, 32], strides = [1, 1]} : vector<2x128xf32> to vector<2x32xf32>
    %59 = vector.extract_strided_slice %57 {offsets = [0, 32], sizes = [2, 32], strides = [1, 1]} : vector<2x128xf32> to vector<2x32xf32>
    %60 = vector.extract_strided_slice %57 {offsets = [0, 96], sizes = [2, 32], strides = [1, 1]} : vector<2x128xf32> to vector<2x32xf32>
    %61 = vector.extract_strided_slice %52 {offsets = [0, 64], sizes = [2, 32], strides = [1, 1]} : vector<2x128xf32> to vector<2x32xf32>
    %62 = math.tanh %61 : vector<2x32xf32>
    %63 = arith.mulf %59, %43 : vector<2x32xf32>
    %64 = arith.mulf %58, %62 : vector<2x32xf32>
    %65 = arith.addf %63, %64 : vector<2x32xf32>
    %66 = math.tanh %65 : vector<2x32xf32>
    %67 = arith.mulf %60, %66 : vector<2x32xf32>
    %68 = tpu.concatenate %67, %45 in 1 : vector<2x32xf32>, vector<2x32xf32> -> vector<2x64xf32>
    %cst_35 = arith.constant dense<0.000000e+00> : vector<2x256xf32>
    %69 = tpu.matmul %68, %38, %cst_35 {dimension_numbers = #tpu.dot_dimension_numbers<[1], [0], [0], [1], [0, 0, 1, 1], [], []>} : vector<2x64xf32>, vector<64x256xf32>, vector<2x256xf32> -> vector<2x256xf32>
    %70 = vector.extract_strided_slice %37 {offsets = [2, 0], sizes = [2, 128], strides = [1, 1]} : vector<16x128xf32> to vector<2x128xf32>
    %71 = vector.extract_strided_slice %69 {offsets = [0, 0], sizes = [2, 128], strides = [1, 1]} : vector<2x256xf32> to vector<2x128xf32>
    %72 = arith.addf %70, %71 : vector<2x128xf32>
    %73 = arith.negf %72 : vector<2x128xf32>
    %74 = math.exp %73 : vector<2x128xf32>
    %cst_36 = arith.constant 1.000000e+00 : f32
    %75 = vector.broadcast %cst_36 : f32 to vector<2x128xf32>
    %76 = arith.addf %75, %74 : vector<2x128xf32>
    %77 = arith.divf %75, %76 : vector<2x128xf32>
    %78 = vector.extract_strided_slice %77 {offsets = [0, 0], sizes = [2, 32], strides = [1, 1]} : vector<2x128xf32> to vector<2x32xf32>
    %79 = vector.extract_strided_slice %77 {offsets = [0, 32], sizes = [2, 32], strides = [1, 1]} : vector<2x128xf32> to vector<2x32xf32>
    %80 = vector.extract_strided_slice %77 {offsets = [0, 96], sizes = [2, 32], strides = [1, 1]} : vector<2x128xf32> to vector<2x32xf32>
    %81 = vector.extract_strided_slice %72 {offsets = [0, 64], sizes = [2, 32], strides = [1, 1]} : vector<2x128xf32> to vector<2x32xf32>
    %82 = math.tanh %81 : vector<2x32xf32>
    %83 = arith.mulf %79, %65 : vector<2x32xf32>
    %84 = arith.mulf %78, %82 : vector<2x32xf32>
    %85 = arith.addf %83, %84 : vector<2x32xf32>
    %86 = math.tanh %85 : vector<2x32xf32>
    %87 = arith.mulf %80, %86 : vector<2x32xf32>
    %88 = vector.extract_strided_slice %69 {offsets = [0, 128], sizes = [2, 128], strides = [1, 1]} : vector<2x256xf32> to vector<2x128xf32>
    %89 = vector.broadcast %39 : vector<1x128xf32> to vector<2x128xf32>
    %90 = arith.addf %88, %89 : vector<2x128xf32>
    %91 = arith.negf %90 : vector<2x128xf32>
    %92 = math.exp %91 : vector<2x128xf32>
    %cst_37 = arith.constant 1.000000e+00 : f32
    %93 = vector.broadcast %cst_37 : f32 to vector<2x128xf32>
    %94 = arith.addf %93, %92 : vector<2x128xf32>
    %95 = arith.divf %93, %94 : vector<2x128xf32>
    %96 = vector.extract_strided_slice %95 {offsets = [0, 0], sizes = [2, 32], strides = [1, 1]} : vector<2x128xf32> to vector<2x32xf32>
    %97 = vector.extract_strided_slice %95 {offsets = [0, 32], sizes = [2, 32], strides = [1, 1]} : vector<2x128xf32> to vector<2x32xf32>
    %98 = vector.extract_strided_slice %95 {offsets = [0, 96], sizes = [2, 32], strides = [1, 1]} : vector<2x128xf32> to vector<2x32xf32>
    %99 = vector.extract_strided_slice %90 {offsets = [0, 64], sizes = [2, 32], strides = [1, 1]} : vector<2x128xf32> to vector<2x32xf32>
    %100 = math.tanh %99 : vector<2x32xf32>
    %101 = arith.mulf %97, %47 : vector<2x32xf32>
    %102 = arith.mulf %96, %100 : vector<2x32xf32>
    %103 = arith.addf %101, %102 : vector<2x32xf32>
    %104 = math.tanh %103 : vector<2x32xf32>
    %105 = arith.mulf %98, %104 : vector<2x32xf32>
    %c0_38 = arith.constant 0 : index
    %c0_39 = arith.constant 0 : index
    %106 = vector.load %arg18[%c0_38, %c0_39] : memref<16x32xf32, #tpu.memory_space<vmem>>, vector<2x32xf32>
    tpu.vector_store %arg18[%c0_38, %c0_39], %105 {strides = array<i32>} : memref<16x32xf32, #tpu.memory_space<vmem>>, vector<2x32xf32>,
    %107 = tpu.concatenate %87, %105 in 1 : vector<2x32xf32>, vector<2x32xf32> -> vector<2x64xf32>
    %cst_40 = arith.constant dense<0.000000e+00> : vector<2x256xf32>
    %108 = tpu.matmul %107, %38, %cst_40 {dimension_numbers = #tpu.dot_dimension_numbers<[1], [0], [0], [1], [0, 0, 1, 1], [], []>} : vector<2x64xf32>, vector<64x256xf32>, vector<2x256xf32> -> vector<2x256xf32>
    %109 = vector.extract_strided_slice %37 {offsets = [4, 0], sizes = [2, 128], strides = [1, 1]} : vector<16x128xf32> to vector<2x128xf32>
    %110 = vector.extract_strided_slice %108 {offsets = [0, 0], sizes = [2, 128], strides = [1, 1]} : vector<2x256xf32> to vector<2x128xf32>
    %111 = arith.addf %109, %110 : vector<2x128xf32>
    %112 = arith.negf %111 : vector<2x128xf32>
    %113 = math.exp %112 : vector<2x128xf32>
    %cst_41 = arith.constant 1.000000e+00 : f32
    %114 = vector.broadcast %cst_41 : f32 to vector<2x128xf32>
    %115 = arith.addf %114, %113 : vector<2x128xf32>
    %116 = arith.divf %114, %115 : vector<2x128xf32>
    %117 = vector.extract_strided_slice %116 {offsets = [0, 0], sizes = [2, 32], strides = [1, 1]} : vector<2x128xf32> to vector<2x32xf32>
    %118 = vector.extract_strided_slice %116 {offsets = [0, 32], sizes = [2, 32], strides = [1, 1]} : vector<2x128xf32> to vector<2x32xf32>
    %119 = vector.extract_strided_slice %116 {offsets = [0, 96], sizes = [2, 32], strides = [1, 1]} : vector<2x128xf32> to vector<2x32xf32>
    %120 = vector.extract_strided_slice %111 {offsets = [0, 64], sizes = [2, 32], strides = [1, 1]} : vector<2x128xf32> to vector<2x32xf32>
    %121 = math.tanh %120 : vector<2x32xf32>
    %122 = arith.mulf %118, %85 : vector<2x32xf32>
    %123 = arith.mulf %117, %121 : vector<2x32xf32>
    %124 = arith.addf %122, %123 : vector<2x32xf32>
    %125 = math.tanh %124 : vector<2x32xf32>
    %126 = arith.mulf %119, %125 : vector<2x32xf32>
    %127 = vector.extract_strided_slice %108 {offsets = [0, 128], sizes = [2, 128], strides = [1, 1]} : vector<2x256xf32> to vector<2x128xf32>
    %128 = vector.broadcast %39 : vector<1x128xf32> to vector<2x128xf32>
    %129 = arith.addf %127, %128 : vector<2x128xf32>
    %130 = arith.negf %129 : vector<2x128xf32>
    %131 = math.exp %130 : vector<2x128xf32>
    %cst_42 = arith.constant 1.000000e+00 : f32
    %132 = vector.broadcast %cst_42 : f32 to vector<2x128xf32>
    %133 = arith.addf %132, %131 : vector<2x128xf32>
    %134 = arith.divf %132, %133 : vector<2x128xf32>
    %135 = vector.extract_strided_slice %134 {offsets = [0, 0], sizes = [2, 32], strides = [1, 1]} : vector<2x128xf32> to vector<2x32xf32>
    %136 = vector.extract_strided_slice %134 {offsets = [0, 32], sizes = [2, 32], strides = [1, 1]} : vector<2x128xf32> to vector<2x32xf32>
    %137 = vector.extract_strided_slice %134 {offsets = [0, 96], sizes = [2, 32], strides = [1, 1]} : vector<2x128xf32> to vector<2x32xf32>
    %138 = vector.extract_strided_slice %129 {offsets = [0, 64], sizes = [2, 32], strides = [1, 1]} : vector<2x128xf32> to vector<2x32xf32>
    %139 = math.tanh %138 : vector<2x32xf32>
    %140 = arith.mulf %136, %103 : vector<2x32xf32>
    %141 = arith.mulf %135, %139 : vector<2x32xf32>
    %142 = arith.addf %140, %141 : vector<2x32xf32>
    %143 = math.tanh %142 : vector<2x32xf32>
    %144 = arith.mulf %137, %143 : vector<2x32xf32>
    %c2 = arith.constant 2 : index
    %c0_43 = arith.constant 0 : index
    %145 = vector.load %arg18[%c2, %c0_43] : memref<16x32xf32, #tpu.memory_space<vmem>>, vector<2x32xf32>
    tpu.vector_store %arg18[%c2, %c0_43], %144 {strides = array<i32>} : memref<16x32xf32, #tpu.memory_space<vmem>>, vector<2x32xf32>,
    %146 = tpu.concatenate %126, %144 in 1 : vector<2x32xf32>, vector<2x32xf32> -> vector<2x64xf32>
    %cst_44 = arith.constant dense<0.000000e+00> : vector<2x256xf32>
    %147 = tpu.matmul %146, %38, %cst_44 {dimension_numbers = #tpu.dot_dimension_numbers<[1], [0], [0], [1], [0, 0, 1, 1], [], []>} : vector<2x64xf32>, vector<64x256xf32>, vector<2x256xf32> -> vector<2x256xf32>
    %148 = vector.extract_strided_slice %37 {offsets = [6, 0], sizes = [2, 128], strides = [1, 1]} : vector<16x128xf32> to vector<2x128xf32>
    %149 = vector.extract_strided_slice %147 {offsets = [0, 0], sizes = [2, 128], strides = [1, 1]} : vector<2x256xf32> to vector<2x128xf32>
    %150 = arith.addf %148, %149 : vector<2x128xf32>
    %151 = arith.negf %150 : vector<2x128xf32>
    %152 = math.exp %151 : vector<2x128xf32>
    %cst_45 = arith.constant 1.000000e+00 : f32
    %153 = vector.broadcast %cst_45 : f32 to vector<2x128xf32>
    %154 = arith.addf %153, %152 : vector<2x128xf32>
    %155 = arith.divf %153, %154 : vector<2x128xf32>
    %156 = vector.extract_strided_slice %155 {offsets = [0, 0], sizes = [2, 32], strides = [1, 1]} : vector<2x128xf32> to vector<2x32xf32>
    %157 = vector.extract_strided_slice %155 {offsets = [0, 32], sizes = [2, 32], strides = [1, 1]} : vector<2x128xf32> to vector<2x32xf32>
    %158 = vector.extract_strided_slice %155 {offsets = [0, 96], sizes = [2, 32], strides = [1, 1]} : vector<2x128xf32> to vector<2x32xf32>
    %159 = vector.extract_strided_slice %150 {offsets = [0, 64], sizes = [2, 32], strides = [1, 1]} : vector<2x128xf32> to vector<2x32xf32>
    %160 = math.tanh %159 : vector<2x32xf32>
    %161 = arith.mulf %157, %124 : vector<2x32xf32>
    %162 = arith.mulf %156, %160 : vector<2x32xf32>
    %163 = arith.addf %161, %162 : vector<2x32xf32>
    %164 = math.tanh %163 : vector<2x32xf32>
    %165 = arith.mulf %158, %164 : vector<2x32xf32>
    %166 = vector.extract_strided_slice %147 {offsets = [0, 128], sizes = [2, 128], strides = [1, 1]} : vector<2x256xf32> to vector<2x128xf32>
    %167 = vector.broadcast %39 : vector<1x128xf32> to vector<2x128xf32>
    %168 = arith.addf %166, %167 : vector<2x128xf32>
    %169 = arith.negf %168 : vector<2x128xf32>
    %170 = math.exp %169 : vector<2x128xf32>
    %cst_46 = arith.constant 1.000000e+00 : f32
    %171 = vector.broadcast %cst_46 : f32 to vector<2x128xf32>
    %172 = arith.addf %171, %170 : vector<2x128xf32>
    %173 = arith.divf %171, %172 : vector<2x128xf32>
    %174 = vector.extract_strided_slice %173 {offsets = [0, 0], sizes = [2, 32], strides = [1, 1]} : vector<2x128xf32> to vector<2x32xf32>
    %175 = vector.extract_strided_slice %173 {offsets = [0, 32], sizes = [2, 32], strides = [1, 1]} : vector<2x128xf32> to vector<2x32xf32>
    %176 = vector.extract_strided_slice %173 {offsets = [0, 96], sizes = [2, 32], strides = [1, 1]} : vector<2x128xf32> to vector<2x32xf32>
    %177 = vector.extract_strided_slice %168 {offsets = [0, 64], sizes = [2, 32], strides = [1, 1]} : vector<2x128xf32> to vector<2x32xf32>
    %178 = math.tanh %177 : vector<2x32xf32>
    %179 = arith.mulf %175, %142 : vector<2x32xf32>
    %180 = arith.mulf %174, %178 : vector<2x32xf32>
    %181 = arith.addf %179, %180 : vector<2x32xf32>
    %182 = math.tanh %181 : vector<2x32xf32>
    %183 = arith.mulf %176, %182 : vector<2x32xf32>
    %c4 = arith.constant 4 : index
    %c0_47 = arith.constant 0 : index
    %184 = vector.load %arg18[%c4, %c0_47] : memref<16x32xf32, #tpu.memory_space<vmem>>, vector<2x32xf32>
    tpu.vector_store %arg18[%c4, %c0_47], %183 {strides = array<i32>} : memref<16x32xf32, #tpu.memory_space<vmem>>, vector<2x32xf32>,
    %185 = tpu.concatenate %165, %183 in 1 : vector<2x32xf32>, vector<2x32xf32> -> vector<2x64xf32>
    %cst_48 = arith.constant dense<0.000000e+00> : vector<2x256xf32>
    %186 = tpu.matmul %185, %38, %cst_48 {dimension_numbers = #tpu.dot_dimension_numbers<[1], [0], [0], [1], [0, 0, 1, 1], [], []>} : vector<2x64xf32>, vector<64x256xf32>, vector<2x256xf32> -> vector<2x256xf32>
    %187 = vector.extract_strided_slice %37 {offsets = [8, 0], sizes = [2, 128], strides = [1, 1]} : vector<16x128xf32> to vector<2x128xf32>
    %188 = vector.extract_strided_slice %186 {offsets = [0, 0], sizes = [2, 128], strides = [1, 1]} : vector<2x256xf32> to vector<2x128xf32>
    %189 = arith.addf %187, %188 : vector<2x128xf32>
    %190 = arith.negf %189 : vector<2x128xf32>
    %191 = math.exp %190 : vector<2x128xf32>
    %cst_49 = arith.constant 1.000000e+00 : f32
    %192 = vector.broadcast %cst_49 : f32 to vector<2x128xf32>
    %193 = arith.addf %192, %191 : vector<2x128xf32>
    %194 = arith.divf %192, %193 : vector<2x128xf32>
    %195 = vector.extract_strided_slice %194 {offsets = [0, 0], sizes = [2, 32], strides = [1, 1]} : vector<2x128xf32> to vector<2x32xf32>
    %196 = vector.extract_strided_slice %194 {offsets = [0, 32], sizes = [2, 32], strides = [1, 1]} : vector<2x128xf32> to vector<2x32xf32>
    %197 = vector.extract_strided_slice %194 {offsets = [0, 96], sizes = [2, 32], strides = [1, 1]} : vector<2x128xf32> to vector<2x32xf32>
    %198 = vector.extract_strided_slice %189 {offsets = [0, 64], sizes = [2, 32], strides = [1, 1]} : vector<2x128xf32> to vector<2x32xf32>
    %199 = math.tanh %198 : vector<2x32xf32>
    %200 = arith.mulf %196, %163 : vector<2x32xf32>
    %201 = arith.mulf %195, %199 : vector<2x32xf32>
    %202 = arith.addf %200, %201 : vector<2x32xf32>
    %203 = math.tanh %202 : vector<2x32xf32>
    %204 = arith.mulf %197, %203 : vector<2x32xf32>
    %205 = vector.extract_strided_slice %186 {offsets = [0, 128], sizes = [2, 128], strides = [1, 1]} : vector<2x256xf32> to vector<2x128xf32>
    %206 = vector.broadcast %39 : vector<1x128xf32> to vector<2x128xf32>
    %207 = arith.addf %205, %206 : vector<2x128xf32>
    %208 = arith.negf %207 : vector<2x128xf32>
    %209 = math.exp %208 : vector<2x128xf32>
    %cst_50 = arith.constant 1.000000e+00 : f32
    %210 = vector.broadcast %cst_50 : f32 to vector<2x128xf32>
    %211 = arith.addf %210, %209 : vector<2x128xf32>
    %212 = arith.divf %210, %211 : vector<2x128xf32>
    %213 = vector.extract_strided_slice %212 {offsets = [0, 0], sizes = [2, 32], strides = [1, 1]} : vector<2x128xf32> to vector<2x32xf32>
    %214 = vector.extract_strided_slice %212 {offsets = [0, 32], sizes = [2, 32], strides = [1, 1]} : vector<2x128xf32> to vector<2x32xf32>
    %215 = vector.extract_strided_slice %212 {offsets = [0, 96], sizes = [2, 32], strides = [1, 1]} : vector<2x128xf32> to vector<2x32xf32>
    %216 = vector.extract_strided_slice %207 {offsets = [0, 64], sizes = [2, 32], strides = [1, 1]} : vector<2x128xf32> to vector<2x32xf32>
    %217 = math.tanh %216 : vector<2x32xf32>
    %218 = arith.mulf %214, %181 : vector<2x32xf32>
    %219 = arith.mulf %213, %217 : vector<2x32xf32>
    %220 = arith.addf %218, %219 : vector<2x32xf32>
    %221 = math.tanh %220 : vector<2x32xf32>
    %222 = arith.mulf %215, %221 : vector<2x32xf32>
    %c6 = arith.constant 6 : index
    %c0_51 = arith.constant 0 : index
    %223 = vector.load %arg18[%c6, %c0_51] : memref<16x32xf32, #tpu.memory_space<vmem>>, vector<2x32xf32>
    tpu.vector_store %arg18[%c6, %c0_51], %222 {strides = array<i32>} : memref<16x32xf32, #tpu.memory_space<vmem>>, vector<2x32xf32>,
    %224 = tpu.concatenate %204, %222 in 1 : vector<2x32xf32>, vector<2x32xf32> -> vector<2x64xf32>
    %cst_52 = arith.constant dense<0.000000e+00> : vector<2x256xf32>
    %225 = tpu.matmul %224, %38, %cst_52 {dimension_numbers = #tpu.dot_dimension_numbers<[1], [0], [0], [1], [0, 0, 1, 1], [], []>} : vector<2x64xf32>, vector<64x256xf32>, vector<2x256xf32> -> vector<2x256xf32>
    %226 = vector.extract_strided_slice %37 {offsets = [10, 0], sizes = [2, 128], strides = [1, 1]} : vector<16x128xf32> to vector<2x128xf32>
    %227 = vector.extract_strided_slice %225 {offsets = [0, 0], sizes = [2, 128], strides = [1, 1]} : vector<2x256xf32> to vector<2x128xf32>
    %228 = arith.addf %226, %227 : vector<2x128xf32>
    %229 = arith.negf %228 : vector<2x128xf32>
    %230 = math.exp %229 : vector<2x128xf32>
    %cst_53 = arith.constant 1.000000e+00 : f32
    %231 = vector.broadcast %cst_53 : f32 to vector<2x128xf32>
    %232 = arith.addf %231, %230 : vector<2x128xf32>
    %233 = arith.divf %231, %232 : vector<2x128xf32>
    %234 = vector.extract_strided_slice %233 {offsets = [0, 0], sizes = [2, 32], strides = [1, 1]} : vector<2x128xf32> to vector<2x32xf32>
    %235 = vector.extract_strided_slice %233 {offsets = [0, 32], sizes = [2, 32], strides = [1, 1]} : vector<2x128xf32> to vector<2x32xf32>
    %236 = vector.extract_strided_slice %233 {offsets = [0, 96], sizes = [2, 32], strides = [1, 1]} : vector<2x128xf32> to vector<2x32xf32>
    %237 = vector.extract_strided_slice %228 {offsets = [0, 64], sizes = [2, 32], strides = [1, 1]} : vector<2x128xf32> to vector<2x32xf32>
    %238 = math.tanh %237 : vector<2x32xf32>
    %239 = arith.mulf %235, %202 : vector<2x32xf32>
    %240 = arith.mulf %234, %238 : vector<2x32xf32>
    %241 = arith.addf %239, %240 : vector<2x32xf32>
    %242 = math.tanh %241 : vector<2x32xf32>
    %243 = arith.mulf %236, %242 : vector<2x32xf32>
    %244 = vector.extract_strided_slice %225 {offsets = [0, 128], sizes = [2, 128], strides = [1, 1]} : vector<2x256xf32> to vector<2x128xf32>
    %245 = vector.broadcast %39 : vector<1x128xf32> to vector<2x128xf32>
    %246 = arith.addf %244, %245 : vector<2x128xf32>
    %247 = arith.negf %246 : vector<2x128xf32>
    %248 = math.exp %247 : vector<2x128xf32>
    %cst_54 = arith.constant 1.000000e+00 : f32
    %249 = vector.broadcast %cst_54 : f32 to vector<2x128xf32>
    %250 = arith.addf %249, %248 : vector<2x128xf32>
    %251 = arith.divf %249, %250 : vector<2x128xf32>
    %252 = vector.extract_strided_slice %251 {offsets = [0, 0], sizes = [2, 32], strides = [1, 1]} : vector<2x128xf32> to vector<2x32xf32>
    %253 = vector.extract_strided_slice %251 {offsets = [0, 32], sizes = [2, 32], strides = [1, 1]} : vector<2x128xf32> to vector<2x32xf32>
    %254 = vector.extract_strided_slice %251 {offsets = [0, 96], sizes = [2, 32], strides = [1, 1]} : vector<2x128xf32> to vector<2x32xf32>
    %255 = vector.extract_strided_slice %246 {offsets = [0, 64], sizes = [2, 32], strides = [1, 1]} : vector<2x128xf32> to vector<2x32xf32>
    %256 = math.tanh %255 : vector<2x32xf32>
    %257 = arith.mulf %253, %220 : vector<2x32xf32>
    %258 = arith.mulf %252, %256 : vector<2x32xf32>
    %259 = arith.addf %257, %258 : vector<2x32xf32>
    %260 = math.tanh %259 : vector<2x32xf32>
    %261 = arith.mulf %254, %260 : vector<2x32xf32>
    %c8 = arith.constant 8 : index
    %c0_55 = arith.constant 0 : index
    %262 = vector.load %arg18[%c8, %c0_55] : memref<16x32xf32, #tpu.memory_space<vmem>>, vector<2x32xf32>
    tpu.vector_store %arg18[%c8, %c0_55], %261 {strides = array<i32>} : memref<16x32xf32, #tpu.memory_space<vmem>>, vector<2x32xf32>,
    %263 = tpu.concatenate %243, %261 in 1 : vector<2x32xf32>, vector<2x32xf32> -> vector<2x64xf32>
    %cst_56 = arith.constant dense<0.000000e+00> : vector<2x256xf32>
    %264 = tpu.matmul %263, %38, %cst_56 {dimension_numbers = #tpu.dot_dimension_numbers<[1], [0], [0], [1], [0, 0, 1, 1], [], []>} : vector<2x64xf32>, vector<64x256xf32>, vector<2x256xf32> -> vector<2x256xf32>
    %265 = vector.extract_strided_slice %37 {offsets = [12, 0], sizes = [2, 128], strides = [1, 1]} : vector<16x128xf32> to vector<2x128xf32>
    %266 = vector.extract_strided_slice %264 {offsets = [0, 0], sizes = [2, 128], strides = [1, 1]} : vector<2x256xf32> to vector<2x128xf32>
    %267 = arith.addf %265, %266 : vector<2x128xf32>
    %268 = arith.negf %267 : vector<2x128xf32>
    %269 = math.exp %268 : vector<2x128xf32>
    %cst_57 = arith.constant 1.000000e+00 : f32
    %270 = vector.broadcast %cst_57 : f32 to vector<2x128xf32>
    %271 = arith.addf %270, %269 : vector<2x128xf32>
    %272 = arith.divf %270, %271 : vector<2x128xf32>
    %273 = vector.extract_strided_slice %272 {offsets = [0, 0], sizes = [2, 32], strides = [1, 1]} : vector<2x128xf32> to vector<2x32xf32>
    %274 = vector.extract_strided_slice %272 {offsets = [0, 32], sizes = [2, 32], strides = [1, 1]} : vector<2x128xf32> to vector<2x32xf32>
    %275 = vector.extract_strided_slice %272 {offsets = [0, 96], sizes = [2, 32], strides = [1, 1]} : vector<2x128xf32> to vector<2x32xf32>
    %276 = vector.extract_strided_slice %267 {offsets = [0, 64], sizes = [2, 32], strides = [1, 1]} : vector<2x128xf32> to vector<2x32xf32>
    %277 = math.tanh %276 : vector<2x32xf32>
    %278 = arith.mulf %274, %241 : vector<2x32xf32>
    %279 = arith.mulf %273, %277 : vector<2x32xf32>
    %280 = arith.addf %278, %279 : vector<2x32xf32>
    %281 = math.tanh %280 : vector<2x32xf32>
    %282 = arith.mulf %275, %281 : vector<2x32xf32>
    %283 = vector.extract_strided_slice %264 {offsets = [0, 128], sizes = [2, 128], strides = [1, 1]} : vector<2x256xf32> to vector<2x128xf32>
    %284 = vector.broadcast %39 : vector<1x128xf32> to vector<2x128xf32>
    %285 = arith.addf %283, %284 : vector<2x128xf32>
    %286 = arith.negf %285 : vector<2x128xf32>
    %287 = math.exp %286 : vector<2x128xf32>
    %cst_58 = arith.constant 1.000000e+00 : f32
    %288 = vector.broadcast %cst_58 : f32 to vector<2x128xf32>
    %289 = arith.addf %288, %287 : vector<2x128xf32>
    %290 = arith.divf %288, %289 : vector<2x128xf32>
    %291 = vector.extract_strided_slice %290 {offsets = [0, 0], sizes = [2, 32], strides = [1, 1]} : vector<2x128xf32> to vector<2x32xf32>
    %292 = vector.extract_strided_slice %290 {offsets = [0, 32], sizes = [2, 32], strides = [1, 1]} : vector<2x128xf32> to vector<2x32xf32>
    %293 = vector.extract_strided_slice %290 {offsets = [0, 96], sizes = [2, 32], strides = [1, 1]} : vector<2x128xf32> to vector<2x32xf32>
    %294 = vector.extract_strided_slice %285 {offsets = [0, 64], sizes = [2, 32], strides = [1, 1]} : vector<2x128xf32> to vector<2x32xf32>
    %295 = math.tanh %294 : vector<2x32xf32>
    %296 = arith.mulf %292, %259 : vector<2x32xf32>
    %297 = arith.mulf %291, %295 : vector<2x32xf32>
    %298 = arith.addf %296, %297 : vector<2x32xf32>
    %299 = math.tanh %298 : vector<2x32xf32>
    %300 = arith.mulf %293, %299 : vector<2x32xf32>
    %c10 = arith.constant 10 : index
    %c0_59 = arith.constant 0 : index
    %301 = vector.load %arg18[%c10, %c0_59] : memref<16x32xf32, #tpu.memory_space<vmem>>, vector<2x32xf32>
    tpu.vector_store %arg18[%c10, %c0_59], %300 {strides = array<i32>} : memref<16x32xf32, #tpu.memory_space<vmem>>, vector<2x32xf32>,
    %302 = tpu.concatenate %282, %300 in 1 : vector<2x32xf32>, vector<2x32xf32> -> vector<2x64xf32>
    %cst_60 = arith.constant dense<0.000000e+00> : vector<2x256xf32>
    %303 = tpu.matmul %302, %38, %cst_60 {dimension_numbers = #tpu.dot_dimension_numbers<[1], [0], [0], [1], [0, 0, 1, 1], [], []>} : vector<2x64xf32>, vector<64x256xf32>, vector<2x256xf32> -> vector<2x256xf32>
    %304 = vector.extract_strided_slice %37 {offsets = [14, 0], sizes = [2, 128], strides = [1, 1]} : vector<16x128xf32> to vector<2x128xf32>
    %305 = vector.extract_strided_slice %303 {offsets = [0, 0], sizes = [2, 128], strides = [1, 1]} : vector<2x256xf32> to vector<2x128xf32>
    %306 = arith.addf %304, %305 : vector<2x128xf32>
    %307 = arith.negf %306 : vector<2x128xf32>
    %308 = math.exp %307 : vector<2x128xf32>
    %cst_61 = arith.constant 1.000000e+00 : f32
    %309 = vector.broadcast %cst_61 : f32 to vector<2x128xf32>
    %310 = arith.addf %309, %308 : vector<2x128xf32>
    %311 = arith.divf %309, %310 : vector<2x128xf32>
    %312 = vector.extract_strided_slice %311 {offsets = [0, 0], sizes = [2, 32], strides = [1, 1]} : vector<2x128xf32> to vector<2x32xf32>
    %313 = vector.extract_strided_slice %311 {offsets = [0, 32], sizes = [2, 32], strides = [1, 1]} : vector<2x128xf32> to vector<2x32xf32>
    %314 = vector.extract_strided_slice %311 {offsets = [0, 96], sizes = [2, 32], strides = [1, 1]} : vector<2x128xf32> to vector<2x32xf32>
    %315 = vector.extract_strided_slice %306 {offsets = [0, 64], sizes = [2, 32], strides = [1, 1]} : vector<2x128xf32> to vector<2x32xf32>
    %316 = math.tanh %315 : vector<2x32xf32>
    %317 = arith.mulf %313, %280 : vector<2x32xf32>
    %318 = arith.mulf %312, %316 : vector<2x32xf32>
    %319 = arith.addf %317, %318 : vector<2x32xf32>
    %320 = math.tanh %319 : vector<2x32xf32>
    %321 = arith.mulf %314, %320 : vector<2x32xf32>
    %322 = vector.extract_strided_slice %303 {offsets = [0, 128], sizes = [2, 128], strides = [1, 1]} : vector<2x256xf32> to vector<2x128xf32>
    %323 = vector.broadcast %39 : vector<1x128xf32> to vector<2x128xf32>
    %324 = arith.addf %322, %323 : vector<2x128xf32>
    %325 = arith.negf %324 : vector<2x128xf32>
    %326 = math.exp %325 : vector<2x128xf32>
    %cst_62 = arith.constant 1.000000e+00 : f32
    %327 = vector.broadcast %cst_62 : f32 to vector<2x128xf32>
    %328 = arith.addf %327, %326 : vector<2x128xf32>
    %329 = arith.divf %327, %328 : vector<2x128xf32>
    %330 = vector.extract_strided_slice %329 {offsets = [0, 0], sizes = [2, 32], strides = [1, 1]} : vector<2x128xf32> to vector<2x32xf32>
    %331 = vector.extract_strided_slice %329 {offsets = [0, 32], sizes = [2, 32], strides = [1, 1]} : vector<2x128xf32> to vector<2x32xf32>
    %332 = vector.extract_strided_slice %329 {offsets = [0, 96], sizes = [2, 32], strides = [1, 1]} : vector<2x128xf32> to vector<2x32xf32>
    %333 = vector.extract_strided_slice %324 {offsets = [0, 64], sizes = [2, 32], strides = [1, 1]} : vector<2x128xf32> to vector<2x32xf32>
    %334 = math.tanh %333 : vector<2x32xf32>
    %335 = arith.mulf %331, %298 : vector<2x32xf32>
    %336 = arith.mulf %330, %334 : vector<2x32xf32>
    %337 = arith.addf %335, %336 : vector<2x32xf32>
    %338 = math.tanh %337 : vector<2x32xf32>
    %339 = arith.mulf %332, %338 : vector<2x32xf32>
    %c12 = arith.constant 12 : index
    %c0_63 = arith.constant 0 : index
    %340 = vector.load %arg18[%c12, %c0_63] : memref<16x32xf32, #tpu.memory_space<vmem>>, vector<2x32xf32>
    tpu.vector_store %arg18[%c12, %c0_63], %339 {strides = array<i32>} : memref<16x32xf32, #tpu.memory_space<vmem>>, vector<2x32xf32>,
    %341 = tpu.concatenate %321, %339 in 1 : vector<2x32xf32>, vector<2x32xf32> -> vector<2x64xf32>
    %cst_64 = arith.constant dense<0.000000e+00> : vector<2x256xf32>
    %342 = tpu.matmul %341, %38, %cst_64 {dimension_numbers = #tpu.dot_dimension_numbers<[1], [0], [0], [1], [0, 0, 1, 1], [], []>} : vector<2x64xf32>, vector<64x256xf32>, vector<2x256xf32> -> vector<2x256xf32>
    %343 = vector.extract_strided_slice %342 {offsets = [0, 128], sizes = [2, 128], strides = [1, 1]} : vector<2x256xf32> to vector<2x128xf32>
    %344 = vector.broadcast %39 : vector<1x128xf32> to vector<2x128xf32>
    %345 = arith.addf %343, %344 : vector<2x128xf32>
    %346 = arith.negf %345 : vector<2x128xf32>
    %347 = math.exp %346 : vector<2x128xf32>
    %cst_65 = arith.constant 1.000000e+00 : f32
    %348 = vector.broadcast %cst_65 : f32 to vector<2x128xf32>
    %349 = arith.addf %348, %347 : vector<2x128xf32>
    %350 = arith.divf %348, %349 : vector<2x128xf32>
    %351 = vector.extract_strided_slice %350 {offsets = [0, 0], sizes = [2, 32], strides = [1, 1]} : vector<2x128xf32> to vector<2x32xf32>
    %352 = vector.extract_strided_slice %350 {offsets = [0, 32], sizes = [2, 32], strides = [1, 1]} : vector<2x128xf32> to vector<2x32xf32>
    %353 = vector.extract_strided_slice %350 {offsets = [0, 96], sizes = [2, 32], strides = [1, 1]} : vector<2x128xf32> to vector<2x32xf32>
    %354 = vector.extract_strided_slice %345 {offsets = [0, 64], sizes = [2, 32], strides = [1, 1]} : vector<2x128xf32> to vector<2x32xf32>
    %355 = math.tanh %354 : vector<2x32xf32>
    %356 = arith.mulf %352, %337 : vector<2x32xf32>
    %357 = arith.mulf %351, %355 : vector<2x32xf32>
    %358 = arith.addf %356, %357 : vector<2x32xf32>
    %359 = math.tanh %358 : vector<2x32xf32>
    %360 = arith.mulf %353, %359 : vector<2x32xf32>
    %c14 = arith.constant 14 : index
    %c0_66 = arith.constant 0 : index
    %361 = vector.load %arg18[%c14, %c0_66] : memref<16x32xf32, #tpu.memory_space<vmem>>, vector<2x32xf32>
    tpu.vector_store %arg18[%c14, %c0_66], %360 {strides = array<i32>} : memref<16x32xf32, #tpu.memory_space<vmem>>, vector<2x32xf32>,
    %c0_67 = arith.constant 0 : index
    %c0_68 = arith.constant 0 : index
    %c0_69 = arith.constant 0 : index
    %362 = vector.load %arg16[%c0_67, %c0_68, %c0_69] : memref<2x2x32xf32, #tpu.memory_space<vmem>>, vector<1x2x32xf32>
    %363 = vector.shape_cast %362 : vector<1x2x32xf32> to vector<2x32xf32>
    %364 = vector.shape_cast %321 : vector<2x32xf32> to vector<1x2x32xf32>
    tpu.vector_store %arg16[%c0_67, %c0_68, %c0_69], %364 {strides = array<i32>} : memref<2x2x32xf32, #tpu.memory_space<vmem>>, vector<1x2x32xf32>,
    %c0_70 = arith.constant 0 : index
    %c0_71 = arith.constant 0 : index
    %c0_72 = arith.constant 0 : index
    %365 = vector.load %arg17[%c0_70, %c0_71, %c0_72] : memref<2x2x32xf32, #tpu.memory_space<vmem>>, vector<1x2x32xf32>
    %366 = vector.shape_cast %365 : vector<1x2x32xf32> to vector<2x32xf32>
    %367 = vector.shape_cast %319 : vector<2x32xf32> to vector<1x2x32xf32>
    tpu.vector_store %arg17[%c0_70, %c0_71, %c0_72], %367 {strides = array<i32>} : memref<2x2x32xf32, #tpu.memory_space<vmem>>, vector<1x2x32xf32>,
    %c1_73 = arith.constant 1 : index
    %c0_74 = arith.constant 0 : index
    %c0_75 = arith.constant 0 : index
    %368 = vector.load %arg16[%c1_73, %c0_74, %c0_75] : memref<2x2x32xf32, #tpu.memory_space<vmem>>, vector<1x2x32xf32>
    %369 = vector.shape_cast %368 : vector<1x2x32xf32> to vector<2x32xf32>
    %370 = vector.shape_cast %360 : vector<2x32xf32> to vector<1x2x32xf32>
    tpu.vector_store %arg16[%c1_73, %c0_74, %c0_75], %370 {strides = array<i32>} : memref<2x2x32xf32, #tpu.memory_space<vmem>>, vector<1x2x32xf32>,
    %c1_76 = arith.constant 1 : index
    %c0_77 = arith.constant 0 : index
    %c0_78 = arith.constant 0 : index
    %371 = vector.load %arg17[%c1_76, %c0_77, %c0_78] : memref<2x2x32xf32, #tpu.memory_space<vmem>>, vector<1x2x32xf32>
    %372 = vector.shape_cast %371 : vector<1x2x32xf32> to vector<2x32xf32>
    %373 = vector.shape_cast %358 : vector<2x32xf32> to vector<1x2x32xf32>
    tpu.vector_store %arg17[%c1_76, %c0_77, %c0_78], %373 {strides = array<i32>} : memref<2x2x32xf32, #tpu.memory_space<vmem>>, vector<1x2x32xf32>,
    %c0_79 = arith.constant 0 : index
    %c0_80 = arith.constant 0 : index
    %374 = vector.load %arg18[%c0_79, %c0_80] : memref<16x32xf32, #tpu.memory_space<vmem>>, vector<16x32xf32>
    %c0_81 = arith.constant 0 : index
    %c0_82 = arith.constant 0 : index
    %375 = vector.load %arg11[%c0_81, %c0_82] : memref<1x32xf32, #tpu.memory_space<vmem>>, vector<1x32xf32>
    %c0_83 = arith.constant 0 : index
    %c0_84 = arith.constant 0 : index
    %376 = vector.load %arg12[%c0_83, %c0_84] : memref<1x32xf32, #tpu.memory_space<vmem>>, vector<1x32xf32>
    %cst_85 = arith.constant dense<0.000000e+00> : vector<16xf32>
    %377 = vector.multi_reduction <add>, %374, %cst_85 [1] : vector<16x32xf32> to vector<16xf32>
    %378 = vector.shape_cast %377 : vector<16xf32> to vector<16x1xf32>
    %cst_86 = arith.constant 3.200000e+01 : f32
    %379 = vector.broadcast %cst_86 : f32 to vector<16x1xf32>
    %380 = arith.divf %378, %379 : vector<16x1xf32>
    %381 = vector.broadcast %380 : vector<16x1xf32> to vector<16x32xf32>
    %382 = arith.subf %374, %381 : vector<16x32xf32>
    %383 = arith.mulf %382, %382 : vector<16x32xf32>
    %cst_87 = arith.constant dense<0.000000e+00> : vector<16xf32>
    %384 = vector.multi_reduction <add>, %383, %cst_87 [1] : vector<16x32xf32> to vector<16xf32>
    %385 = vector.shape_cast %384 : vector<16xf32> to vector<16x1xf32>
    %cst_88 = arith.constant 3.100000e+01 : f32
    %386 = vector.broadcast %cst_88 : f32 to vector<16x1xf32>
    %387 = arith.divf %385, %386 : vector<16x1xf32>
    %388 = math.sqrt %387 : vector<16x1xf32>
    %cst_89 = arith.constant 9.99999997E-7 : f32
    %389 = vector.broadcast %cst_89 : f32 to vector<16x1xf32>
    %390 = arith.addf %388, %389 : vector<16x1xf32>
    %391 = tpu.reciprocal %390 : vector<16x1xf32> -> vector<16x1xf32>
    %392 = vector.broadcast %380 : vector<16x1xf32> to vector<16x32xf32>
    %393 = arith.subf %374, %392 : vector<16x32xf32>
    %394 = vector.broadcast %375 : vector<1x32xf32> to vector<16x32xf32>
    %395 = arith.mulf %394, %393 : vector<16x32xf32>
    %396 = vector.broadcast %391 : vector<16x1xf32> to vector<16x32xf32>
    %397 = arith.mulf %395, %396 : vector<16x32xf32>
    %398 = vector.broadcast %376 : vector<1x32xf32> to vector<16x32xf32>
    %399 = arith.addf %397, %398 : vector<16x32xf32>
    %400 = arith.addf %399, %7 : vector<16x32xf32>
    %c0_90 = arith.constant 0 : index
    %c0_91 = arith.constant 0 : index
    %401 = vector.load %arg13[%c0_90, %c0_91] : memref<1x32xf32, #tpu.memory_space<vmem>>, vector<1x32xf32>
    %402 = vector.broadcast %401 : vector<1x32xf32> to vector<16x32xf32>
    %403 = arith.mulf %400, %402 : vector<16x32xf32>
    %cst_92 = arith.constant dense<0.000000e+00> : vector<16xf32>
    %404 = vector.multi_reduction <add>, %403, %cst_92 [1] : vector<16x32xf32> to vector<16xf32>
    %405 = vector.shape_cast %404 : vector<16xf32> to vector<16x1xf32>
    %c0_93 = arith.constant 0 : index
    %c0_94 = arith.constant 0 : index
    %406 = vector.load %arg14[%c0_93, %c0_94] : memref<1x1xf32, #tpu.memory_space<vmem>>, vector<1x1xf32>
    %407 = vector.broadcast %406 : vector<1x1xf32> to vector<16x1xf32>
    %408 = arith.addf %405, %407 : vector<16x1xf32>
    %c0_95 = arith.constant 0 : index
    %c0_96 = arith.constant 0 : index
    %409 = vector.load %arg15[%c0_95, %c0_96] : memref<16x1xf32, #tpu.memory_space<vmem>>, vector<16x1xf32>
    tpu.vector_store %arg15[%c0_95, %c0_96], %408 {strides = array<i32>} : memref<16x1xf32, #tpu.memory_space<vmem>>, vector<16x1xf32>,
    return
  }
}

</mosaic_0001>

<llo_original>
// kernel: tpu_custom_call.1
$region0: #{tpu_custom_call.1}
  #allocation0 [shape = 'u32[]', space=smem, size = 0x4, offset = 0x4, fixed_abs, tag = 'smem constant byte address 0x4 - core index']
  #allocation1 [shape = 'u32[72,128]{1,0:T(1,128)}', space=vmem, size = 0x9000, scoped, tag = 'internal scratch']
  #allocation2 [shape = 'f32[16,32]{1,0:T(8,128)}', space=vmem, size = 0x2000, scoped, tag = 'scratch operand']
  #allocation3 [shape = 'f32[1,1]{1,0:T(1,128)S(1)}', space=vmem, size = 0x200, scoped, tag = 'scoped memory for tpu_custom_call.1']
  %s0 = inlined_call_operand.vmem [shape: f32[16,1], index: 0, kind: input, shape index: {}]
  %s1 = inlined_call_operand.vmem [shape: f32[2,2,32], index: 1, kind: input, shape index: {}]
  %s2 = inlined_call_operand.vmem [shape: f32[2,2,32], index: 2, kind: input, shape index: {}]
  %s3 = inlined_call_operand.vmem [shape: f32[1,32], index: 3, kind: input, shape index: {}]
  %s4 = inlined_call_operand.vmem [shape: f32[1,32], index: 4, kind: input, shape index: {}]
  %s5 = inlined_call_operand.vmem [shape: f32[1,32], index: 5, kind: input, shape index: {}]
  %s6 = inlined_call_operand.vmem [shape: f32[1,32], index: 6, kind: input, shape index: {}]
  %s7 = inlined_call_operand.hbm [shape: f32[32,128], index: 7, kind: input, shape index: {}]
  %s8 = inlined_call_operand.vmem [shape: f32[1,128], index: 8, kind: input, shape index: {}]
  %s9 = inlined_call_operand.hbm [shape: f32[64,256], index: 9, kind: input, shape index: {}]
  %s10 = inlined_call_operand.vmem [shape: f32[1,128], index: 10, kind: input, shape index: {}]
  %s11 = inlined_call_operand.vmem [shape: f32[1,32], index: 11, kind: input, shape index: {}]
  %s12 = inlined_call_operand.vmem [shape: f32[1,32], index: 12, kind: input, shape index: {}]
  %s13 = inlined_call_operand.vmem [shape: f32[1,32], index: 13, kind: input, shape index: {}]
  %s14 = inlined_call_operand.<no memory space> [shape: f32[1,1], index: 14, kind: input, shape index: {}]
  %s15 = inlined_call_operand.vmem [shape: f32[16,1], index: 15, kind: output, shape index: {0}]
  %s16 = inlined_call_operand.hbm [shape: f32[2,2,32], index: 16, kind: output, shape index: {1}]
  %s17 = inlined_call_operand.hbm [shape: f32[2,2,32], index: 17, kind: output, shape index: {2}]
  %18 = xla_tuple %s15, %s16, %s17
  %s19 = sld [smem:[#allocation0]]
  $region94: #{tpu_custom_call.1} parent=0
    _
  %s21 = ssub.s32 1, %s19
  %s22 = scalar_select 0, %s21, %s19
  %v23 = vstv %s14
  %24 = vst [vmem:[#allocation3] sm:$0x1] %v23
  $region1: #{tpu_custom_call.1} parent=0
    #allocation4 [shape = 'u8[16384]{0}', space=vmem, size = 0x4000, scoped, tag = 'input window, operand 7, single buffered']
    #allocation5 [shape = 's32[1]{0}', space=sflag, size = 0x4, scoped, tag = 'scoped memory for tpu_custom_call.1']
    #allocation6 [shape = 's32[1]{0}', space=sflag, size = 0x4, scoped, tag = 'scoped memory for tpu_custom_call.1']
    #allocation7 [shape = 'u8[65536]{0}', space=vmem, size = 0x10000, scoped, tag = 'input window, operand 9, single buffered']
    #allocation8 [shape = 's32[1]{0}', space=sflag, size = 0x4, scoped, tag = 'scoped memory for tpu_custom_call.1']
    #allocation9 [shape = 'u8[2048]{0}', space=vmem, size = 0x800, scoped, tag = 'output window, operand 1, single buffered']
    #allocation10 [shape = 'u8[2048]{0}', space=vmem, size = 0x800, scoped, tag = 'output window, operand 2, single buffered']
    #allocation11 [shape = 's32[1]{0}', space=sflag, size = 0x4, scoped, tag = 'scoped memory for tpu_custom_call.1']
    %25 = vsyncpa [#allocation5], 0
    %26 = vsyncpa [#allocation8], 0
    %27 = vsyncpa [#allocation6], 0
    %28 = vsyncpa [#allocation11], 0
    // Predicated region
    $region2: #{tpu_custom_call.1} parent=1 // pred_check
      _
    $region3: #{tpu_custom_call.1} parent=1 // pred_check_branch
      %30 = sbr.rel (0) target = $region5
    $region4: #{tpu_custom_call.1} parent=1 // pred_region
      _
    $region5: #{tpu_custom_call.1} parent=1 // pred_fallthru
      _
    // Predicated region
    $region6: #{tpu_custom_call.1} parent=1 // pred_check
      _
    $region7: #{tpu_custom_call.1} parent=1 // pred_check_branch
      %32 = sbr.rel (0) target = $region9
    $region8: #{tpu_custom_call.1} parent=1 // pred_region
      _
    $region9: #{tpu_custom_call.1} parent=1 // pred_fallthru
      _
    // Predicated region
    $region10: #{tpu_custom_call.1} parent=1 // pred_check
      _
    $region11: #{tpu_custom_call.1} parent=1 // pred_check_branch
      %34 = sbr.rel (0) target = $region13
    $region12: #{tpu_custom_call.1} parent=1 // pred_region
      _
    $region13: #{tpu_custom_call.1} parent=1 // pred_fallthru
      _
    // Predicated region
    $region14: #{tpu_custom_call.1} parent=1 // pred_check
      _
    $region15: #{tpu_custom_call.1} parent=1 // pred_check_branch
      %36 = sbr.rel (0) target = $region17
    $region16: #{tpu_custom_call.1} parent=1 // pred_region
      _
    $region17: #{tpu_custom_call.1} parent=1 // pred_fallthru
      _
    // Predicated region
    $region18: #{tpu_custom_call.1} parent=1 // pred_check
      _
    $region19: #{tpu_custom_call.1} parent=1 // pred_check_branch
      %38 = sbr.rel (0) target = $region21
    $region20: #{tpu_custom_call.1} parent=1 // pred_region
      _
    $region21: #{tpu_custom_call.1} parent=1 // pred_fallthru
      _
    // Predicated region
    $region22: #{tpu_custom_call.1} parent=1 // pred_check
      _
    $region23: #{tpu_custom_call.1} parent=1 // pred_check_branch
      %40 = sbr.rel (0) target = $region25
    $region24: #{tpu_custom_call.1} parent=1 // pred_region
      _
    $region25: #{tpu_custom_call.1} parent=1 // pred_fallthru
      _
    // Predicated region
    $region26: #{tpu_custom_call.1} parent=1 // pred_check
      _
    $region27: #{tpu_custom_call.1} parent=1 // pred_check_branch
      %42 = sbr.rel (0) target = $region29
    $region28: #{tpu_custom_call.1} parent=1 // pred_region
      _
    $region29: #{tpu_custom_call.1} parent=1 // pred_fallthru
      _
    // Predicated region
    $region30: #{tpu_custom_call.1} parent=1 // pred_check
      _
    $region31: #{tpu_custom_call.1} parent=1 // pred_check_branch
      %44 = sbr.rel (0) target = $region33
    $region32: #{tpu_custom_call.1} parent=1 // pred_region
      %46 = vsyncadd [#allocation5], 0
      %s47 = sshll.u32 %s7, 4
      %s48 = int_to_ptr.hbm [resolvable:$true] %s47
      %s49 = sshll.u32 [#allocation4], 4
      %s50 = int_to_ptr.vmem [resolvable:$true] %s49
      %55 = dma.hbm_to_vmem [thread:$0]  %s48, 512, %s50, [#allocation5], 128, 128, 8
    $region33: #{tpu_custom_call.1} parent=1 // pred_fallthru
      _
    // Predicated region
    $region34: #{tpu_custom_call.1} parent=1 // pred_check
      _
    $region35: #{tpu_custom_call.1} parent=1 // pred_check_branch
      %57 = sbr.rel (0) target = $region37
    $region36: #{tpu_custom_call.1} parent=1 // pred_region
      _
    $region37: #{tpu_custom_call.1} parent=1 // pred_fallthru
      _
    // Predicated region
    $region38: #{tpu_custom_call.1} parent=1 // pred_check
      _
    $region39: #{tpu_custom_call.1} parent=1 // pred_check_branch
      %59 = sbr.rel (0) target = $region41
    $region40: #{tpu_custom_call.1} parent=1 // pred_region
      %61 = vsyncadd [#allocation8], 0
      %s62 = sshll.u32 %s9, 4
      %s63 = int_to_ptr.hbm [resolvable:$true] %s62
      %s64 = sshll.u32 [#allocation7], 4
      %s65 = int_to_ptr.vmem [resolvable:$true] %s64
      %70 = dma.hbm_to_vmem [thread:$0]  %s63, 2048, %s65, [#allocation8], 256, 256, 16
    $region41: #{tpu_custom_call.1} parent=1 // pred_fallthru
      _
    // Predicated region
    $region42: #{tpu_custom_call.1} parent=1 // pred_check
      _
    $region43: #{tpu_custom_call.1} parent=1 // pred_check_branch
      %72 = sbr.rel (0) target = $region45
    $region44: #{tpu_custom_call.1} parent=1 // pred_region
      _
    $region45: #{tpu_custom_call.1} parent=1 // pred_fallthru
      _
    // Predicated region
    $region46: #{tpu_custom_call.1} parent=1 // pred_check
      _
    $region47: #{tpu_custom_call.1} parent=1 // pred_check_branch
      %74 = sbr.rel (0) target = $region49
    $region48: #{tpu_custom_call.1} parent=1 // pred_region
      _
    $region49: #{tpu_custom_call.1} parent=1 // pred_fallthru
      _
    // Predicated region
    $region50: #{tpu_custom_call.1} parent=1 // pred_check
      _
    $region51: #{tpu_custom_call.1} parent=1 // pred_check_branch
      %76 = sbr.rel (0) target = $region53
    $region52: #{tpu_custom_call.1} parent=1 // pred_region
      _
    $region53: #{tpu_custom_call.1} parent=1 // pred_fallthru
      _
    // Predicated region
    $region54: #{tpu_custom_call.1} parent=1 // pred_check
      _
    $region55: #{tpu_custom_call.1} parent=1 // pred_check_branch
      %78 = sbr.rel (0) target = $region57
    $region56: #{tpu_custom_call.1} parent=1 // pred_region
      _
    $region57: #{tpu_custom_call.1} parent=1 // pred_fallthru
      _
    // Predicated region
    $region58: #{tpu_custom_call.1} parent=1 // pred_check
      _
    $region59: #{tpu_custom_call.1} parent=1 // pred_check_branch
      %80 = sbr.rel (0) target = $region61
    $region60: #{tpu_custom_call.1} parent=1 // pred_region
      _
    $region61: #{tpu_custom_call.1} parent=1 // pred_fallthru
      _
    // Predicated region
    $region62: #{tpu_custom_call.1} parent=1 // pred_check
      _
    $region63: #{tpu_custom_call.1} parent=1 // pred_check_branch
      %82 = sbr.rel (0) target = $region65
    $region64: #{tpu_custom_call.1} parent=1 // pred_region
      %84 = dma.done [#allocation5], 512
    $region65: #{tpu_custom_call.1} parent=1 // pred_fallthru
      _
    // Predicated region
    $region66: #{tpu_custom_call.1} parent=1 // pred_check
      _
    $region67: #{tpu_custom_call.1} parent=1 // pred_check_branch
      %86 = sbr.rel (0) target = $region69
    $region68: #{tpu_custom_call.1} parent=1 // pred_region
      %88 = dma.done [#allocation8], 2048
    $region69: #{tpu_custom_call.1} parent=1 // pred_fallthru
      _
    %v89 = vld [vmem:[%s0] sm:$0xff]
    %v90 = vld [vmem:[%s0 + $0x8] sm:$0xff]
    %v91 = vld [vmem:[%s3] sm:$0x1]
    %93 = vset.pattern.permute.xlu0 0
    %94 = vperm.xlu0 %93, %v89
    %v95 = vpop.permute.xlu0 %94
    %98 = vset.pattern.permute.xlu0 0
    %99 = vperm.xlu0 %98, %v90
    %v100 = vpop.permute.xlu0 %99
    %v103 = vperm.slane %v91, 0
    %v105 = vmul.f32 %v95, %v103
    %v106 = vmul.f32 %v100, %v103
    %v107 = vld [vmem:[%s4] sm:$0x1]
    %v109 = vperm.slane %v107, 0
    %v111 = vadd.f32 %v105, %v109
    %v112 = vadd.f32 %v106, %v109
    %v113 = vld [vmem:[%s5] sm:$0x1]
    %v114 = vld [vmem:[%s6] sm:$0x1]
    %vm115 = vcmask 261120
    %v116 = vsel %vm115, %v111, 0.0
    %117 = vadd.xlane.f32.xlu0 %v116
    %v118 = vpop.xlane.xlu0 %117
    %v119 = vsel %vm115, %v112, 0.0
    %120 = vadd.xlane.f32.xlu0 %v119
    %v121 = vpop.xlane.xlu0 %120
    %v122 = vrcp.pop 32.0
    %v123 = vmul.f32 32.0, %v122
    %v124 = vsub.f32 1.0, %v123
    %v125 = vmul.f32 %v122, %v124
    %v126 = vadd.f32 %v122, %v125
    %vm127 = vweird.f32 %v122
    %v128 = vsel %vm127, %v122, %v126
    %v129 = vmul.f32 %v118, %v128
    %v130 = vmul.f32 %v121, %v128
    %v131 = vsub.f32 %v111, %v129
    %v132 = vsub.f32 %v112, %v130
    %v133 = vmul.f32 %v131, %v131
    %v134 = vmul.f32 %v132, %v132
    %v135 = vsel %vm115, %v133, 0.0
    %136 = vadd.xlane.f32.xlu0 %v135
    %v137 = vpop.xlane.xlu0 %136
    %v138 = vsel %vm115, %v134, 0.0
    %139 = vadd.xlane.f32.xlu0 %v138
    %v140 = vpop.xlane.xlu0 %139
    %v141 = vrcp.pop 31.0
    %v142 = vmul.f32 31.0, %v141
    %v143 = vsub.f32 1.0, %v142
    %v144 = vmul.f32 %v141, %v143
    %v145 = vadd.f32 %v141, %v144
    %vm146 = vweird.f32 %v141
    %v147 = vsel %vm146, %v141, %v145
    %v148 = vmul.f32 %v137, %v147
    %v149 = vmul.f32 %v140, %v147
    %v150 = vrsqrt.pop %v148
    %v151 = vmul.f32 %v150, %v148
    %v152 = vmul.f32 %v151, %v150
    %v153 = vmul.f32 0.5, %v152
    %v154 = vsub.f32 1.5, %v153
    %v155 = vmul.f32 %v150, %v154
    %v156 = vmul.f32 %v148, %v155
    %vm157 = vcmp.eq.f32.partialorder %v148, inf
    %v158 = vsel %vm157, %v148, %v156
    %vm159 = vcmp.eq.f32.partialorder %v148, 0.0
    %v160 = vand.u32 %v148, 2147483648
    %v161 = vsel %vm159, %v160, %v158
    %v162 = vrsqrt.pop %v149
    %v163 = vmul.f32 %v162, %v149
    %v164 = vmul.f32 %v163, %v162
    %v165 = vmul.f32 0.5, %v164
    %v166 = vsub.f32 1.5, %v165
    %v167 = vmul.f32 %v162, %v166
    %v168 = vmul.f32 %v149, %v167
    %vm169 = vcmp.eq.f32.partialorder %v149, inf
    %v170 = vsel %vm169, %v149, %v168
    %vm171 = vcmp.eq.f32.partialorder %v149, 0.0
    %v172 = vand.u32 %v149, 2147483648
    %v173 = vsel %vm171, %v172, %v170
    %v174 = vadd.f32 %v161, 1e-06
    %v175 = vadd.f32 %v173, 1e-06
    %v176 = vrcp.pop %v174
    %v177 = vmul.f32 %v174, %v176
    %v178 = vsub.f32 1.0, %v177
    %v179 = vmul.f32 %v176, %v178
    %v180 = vadd.f32 %v176, %v179
    %vm181 = vweird.f32 %v174
    %vm182 = vweird.f32 %v176
    %vm183 = vmor %vm181, %vm182
    %v184 = vsel %vm183, %v176, %v180
    %v185 = vand.u32 2147483647, %v174
    %vm186 = vcmp.eq.f32.partialorder %v185, 8.507059e+37
    %v187 = vand.u32 %v174, 2147483648
    %v188 = vor.u32 1.1754944e-38, %v187
    %v189 = vsel %vm186, %v188, %v184
    %v190 = vrcp.pop %v175
    %v191 = vmul.f32 %v175, %v190
    %v192 = vsub.f32 1.0, %v191
    %v193 = vmul.f32 %v190, %v192
    %v194 = vadd.f32 %v190, %v193
    %vm195 = vweird.f32 %v175
    %vm196 = vweird.f32 %v190
    %vm197 = vmor %vm195, %vm196
    %v198 = vsel %vm197, %v190, %v194
    %v199 = vand.u32 2147483647, %v175
    %vm200 = vcmp.eq.f32.partialorder %v199, 8.507059e+37
    %v201 = vand.u32 %v175, 2147483648
    %v202 = vor.u32 1.1754944e-38, %v201
    %v203 = vsel %vm200, %v202, %v198
    %v205 = vperm.slane %v113, 0
    %v207 = vmul.f32 %v205, %v131
    %v208 = vmul.f32 %v205, %v132
    %v209 = vmul.f32 %v207, %v189
    %v210 = vmul.f32 %v208, %v203
    %v212 = vperm.slane %v114, 0
    %v214 = vadd.f32 %v209, %v212
    %v215 = vadd.f32 %v210, %v212
    %v216 = vld [vmem:[#allocation4] sm:$0xff]
    %v217 = vld [vmem:[#allocation4 + $0x8] sm:$0xff]
    %v218 = vld [vmem:[#allocation4 + $0x10] sm:$0xff]
    %v219 = vld [vmem:[#allocation4 + $0x18] sm:$0xff]
    %v220 = vld [vmem:[%s8] sm:$0x1]
    %v222 = vperm.slane %v220, 0
    %v225 = vsel %vm115, %v214, 0
    %v228 = vsel %vm115, %v215, 0
    %230 = vmatpush.msra.mxu0 0.0
    %231 = vmatpush.msra.mxu0 0.0
    %232 = vmatpush.msra.mxu0 0.0
    %233 = vmatpush.msra.mxu0 0.0
    %234 = vmatpush.msra.mxu0 0.0
    %235 = vmatpush.msra.mxu0 0.0
    %236 = vmatpush.msra.mxu0 0.0
    %237 = vmatpush.msra.mxu0 0.0
    %238 = vmatpush.msra.mxu0 0.0
    %239 = vmatpush.msra.mxu0 0.0
    %240 = vmatpush.msra.mxu0 0.0
    %241 = vmatpush.msra.mxu0 0.0
    %242 = vmatpush.msra.mxu0 %v219
    %243 = vmatpush.msra.mxu0 %v218
    %244 = vmatpush.msra.mxu0 %v217
    %245 = vmatpush.msra.mxu0 %v216
    %246 = vmatmul.f32.gmra.mxu0 %v225
    %v247 = vpop.f32.mrf.mxu0
    %v248 = vadd.f32 %v222, %v247
    %249 = vmatmul.f32.gmra.mxu0 %v228
    %v250 = vpop.f32.mrf.mxu0
    %v251 = vadd.f32 %v222, %v250
    %252 = vdwg.mxu0
    %v253 = vld [vmem:[#allocation7] sm:$0xff]
    %v254 = vld [vmem:[#allocation7 + $0x8] sm:$0xff]
    %v255 = vld [vmem:[#allocation7 + $0x10] sm:$0xff]
    %v256 = vld [vmem:[#allocation7 + $0x18] sm:$0xff]
    %v257 = vld [vmem:[#allocation7 + $0x20] sm:$0xff]
    %v258 = vld [vmem:[#allocation7 + $0x28] sm:$0xff]
    %v259 = vld [vmem:[#allocation7 + $0x30] sm:$0xff]
    %v260 = vld [vmem:[#allocation7 + $0x38] sm:$0xff]
    %v261 = vld [vmem:[#allocation7 + $0x40] sm:$0xff]
    %v262 = vld [vmem:[#allocation7 + $0x48] sm:$0xff]
    %v263 = vld [vmem:[#allocation7 + $0x50] sm:$0xff]
    %v264 = vld [vmem:[#allocation7 + $0x58] sm:$0xff]
    %v265 = vld [vmem:[#allocation7 + $0x60] sm:$0xff]
    %v266 = vld [vmem:[#allocation7 + $0x68] sm:$0xff]
    %v267 = vld [vmem:[#allocation7 + $0x70] sm:$0xff]
    %v268 = vld [vmem:[#allocation7 + $0x78] sm:$0xff]
    %v269 = vld [vmem:[%s10] sm:$0x1]
    %v270 = vld [vmem:[%s1] sm:$0x3]
    %v271 = vld [vmem:[%s2] sm:$0x3]
    %s272 = scalar_lea.vmem %s1, 2
    %v273 = vld [vmem:[%s272] sm:$0x3]
    %s274 = scalar_lea.vmem %s2, 2
    %v275 = vld [vmem:[%s274] sm:$0x3]
    %277 = vrot.lane.b32.xlu0 %v273, 32
    %v278 = vpop.permute.xlu0 %277
    %v280 = vsel %vm115, %v270, %v278
    %vm281 = vcmask 523264
    %v283 = vsel %vm281, %v280, 0
    %285 = vmatpush.msra.mxu0 0.0
    %286 = vmatpush.msra.mxu0 0.0
    %287 = vmatpush.msra.mxu0 0.0
    %288 = vmatpush.msra.mxu0 0.0
    %289 = vmatpush.msra.mxu0 0.0
    %290 = vmatpush.msra.mxu0 0.0
    %291 = vmatpush.msra.mxu0 0.0
    %292 = vmatpush.msra.mxu0 0.0
    %293 = vmatpush.msra.mxu0 %v267
    %294 = vmatpush.msra.mxu0 %v265
    %295 = vmatpush.msra.mxu0 %v263
    %296 = vmatpush.msra.mxu0 %v261
    %297 = vmatpush.msra.mxu0 %v259
    %298 = vmatpush.msra.mxu0 %v257
    %299 = vmatpush.msra.mxu0 %v255
    %300 = vmatpush.msra.mxu0 %v253
    %301 = vmatmul.f32.gmra.mxu0 %v283
    %v302 = vpop.f32.mrf.mxu0
    %v303 = vadd.f32 0.0, %v302
    %304 = vdwg.mxu0
    %v305 = vadd.f32 %v248, %v303
    %v306 = vxor.u32 %v305, 2147483648
    %v307 = vmul.f32 %v306, 1.442695
    %v308 = vpow.pop %v307
    %v309 = vadd.f32 %v308, 1.0
    %v310 = vrcp.pop %v309
    %v311 = vmul.f32 %v309, %v310
    %v312 = vsub.f32 1.0, %v311
    %v313 = vmul.f32 %v310, %v312
    %v314 = vadd.f32 %v310, %v313
    %vm315 = vweird.f32 %v309
    %vm316 = vweird.f32 %v310
    %vm317 = vmor %vm315, %vm316
    %v318 = vsel %vm317, %v310, %v314
    %v319 = vand.u32 2147483647, %v309
    %vm320 = vcmp.eq.f32.partialorder %v319, 8.507059e+37
    %v321 = vand.u32 %v309, 2147483648
    %v322 = vor.u32 1.1754944e-38, %v321
    %v323 = vsel %vm320, %v322, %v318
    %v324 = vmul.f32 1.0, %v323
    %v325 = vtanh.pop %v305
    %327 = vrot.lane.b32.xlu0 %v271, 32
    %v328 = vpop.permute.xlu0 %327
    %v330 = vmul.f32 %v324, %v328
    %332 = vrot.lane.b32.xlu0 %v325, 64
    %v333 = vpop.permute.xlu0 %332
    %v335 = vmul.f32 %v324, %v333
    %337 = vrot.lane.b32.xlu0 %v335, 32
    %v338 = vpop.permute.xlu0 %337
    %v340 = vadd.f32 %v330, %v338
    %v341 = vtanh.pop %v340
    %343 = vrot.lane.b32.xlu0 %v341, 64
    %v344 = vpop.permute.xlu0 %343
    %v346 = vmul.f32 %v324, %v344
    %348 = vrot.lane.b32.xlu0 %v346, 32
    %v349 = vpop.permute.xlu0 %348
    %v351 = vsel %vm115, %v349, %v278
    %v353 = vsel %vm281, %v351, 0
    %355 = vmatpush.msra.mxu0 0.0
    %356 = vmatpush.msra.mxu0 0.0
    %357 = vmatpush.msra.mxu0 0.0
    %358 = vmatpush.msra.mxu0 0.0
    %359 = vmatpush.msra.mxu0 0.0
    %360 = vmatpush.msra.mxu0 0.0
    %361 = vmatpush.msra.mxu0 0.0
    %362 = vmatpush.msra.mxu0 0.0
    %363 = vmatpush.msra.mxu0 %v267
    %364 = vmatpush.msra.mxu0 %v265
    %365 = vmatpush.msra.mxu0 %v263
    %366 = vmatpush.msra.mxu0 %v261
    %367 = vmatpush.msra.mxu0 %v259
    %368 = vmatpush.msra.mxu0 %v257
    %369 = vmatpush.msra.mxu0 %v255
    %370 = vmatpush.msra.mxu0 %v253
    %371 = vmatmul.f32.gmra.mxu0 %v353
    %v372 = vpop.f32.mrf.mxu0
    %v373 = vadd.f32 0.0, %v372
    %374 = vdwg.mxu0
    %375 = vmatpush.msra.mxu0 0.0
    %376 = vmatpush.msra.mxu0 0.0
    %377 = vmatpush.msra.mxu0 0.0
    %378 = vmatpush.msra.mxu0 0.0
    %379 = vmatpush.msra.mxu0 0.0
    %380 = vmatpush.msra.mxu0 0.0
    %381 = vmatpush.msra.mxu0 0.0
    %382 = vmatpush.msra.mxu0 0.0
    %383 = vmatpush.msra.mxu0 %v268
    %384 = vmatpush.msra.mxu0 %v266
    %385 = vmatpush.msra.mxu0 %v264
    %386 = vmatpush.msra.mxu0 %v262
    %387 = vmatpush.msra.mxu0 %v260
    %388 = vmatpush.msra.mxu0 %v258
    %389 = vmatpush.msra.mxu0 %v256
    %390 = vmatpush.msra.mxu0 %v254
    %391 = vmatmul.f32.gmra.mxu0 %v353
    %v392 = vpop.f32.mrf.mxu0
    %v393 = vadd.f32 0.0, %v392
    %394 = vdwg.mxu0
    %v396 = vrot.slane %v373, 6
    %v398 = vadd.f32 %v248, %v396
    %v399 = vxor.u32 %v398, 2147483648
    %v400 = vmul.f32 %v399, 1.442695
    %v401 = vpow.pop %v400
    %v402 = vadd.f32 %v401, 1.0
    %v403 = vrcp.pop %v402
    %v404 = vmul.f32 %v402, %v403
    %v405 = vsub.f32 1.0, %v404
    %v406 = vmul.f32 %v403, %v405
    %v407 = vadd.f32 %v403, %v406
    %vm408 = vweird.f32 %v402
    %vm409 = vweird.f32 %v403
    %vm410 = vmor %vm408, %vm409
    %v411 = vsel %vm410, %v403, %v407
    %v412 = vand.u32 2147483647, %v402
    %vm413 = vcmp.eq.f32.partialorder %v412, 8.507059e+37
    %v414 = vand.u32 %v402, 2147483648
    %v415 = vor.u32 1.1754944e-38, %v414
    %v416 = vsel %vm413, %v415, %v411
    %v417 = vmul.f32 1.0, %v416
    %v418 = vtanh.pop %v398
    %v420 = vrot.slane %v340, 6
    %v422 = vmul.f32 %v417, %v420
    %424 = vrot.lane.b32.xlu0 %v418, 64
    %v425 = vpop.permute.xlu0 %424
    %v427 = vmul.f32 %v417, %v425
    %429 = vrot.lane.b32.xlu0 %v427, 32
    %v430 = vpop.permute.xlu0 %429
    %v432 = vadd.f32 %v422, %v430
    %v433 = vtanh.pop %v432
    %435 = vrot.lane.b32.xlu0 %v433, 64
    %v436 = vpop.permute.xlu0 %435
    %v438 = vmul.f32 %v417, %v436
    %v440 = vperm.slane %v269, 0
    %v442 = vadd.f32 %v393, %v440
    %v443 = vxor.u32 %v442, 2147483648
    %v444 = vmul.f32 %v443, 1.442695
    %v445 = vpow.pop %v444
    %v446 = vadd.f32 %v445, 1.0
    %v447 = vrcp.pop %v446
    %v448 = vmul.f32 %v446, %v447
    %v449 = vsub.f32 1.0, %v448
    %v450 = vmul.f32 %v447, %v449
    %v451 = vadd.f32 %v447, %v450
    %vm452 = vweird.f32 %v446
    %vm453 = vweird.f32 %v447
    %vm454 = vmor %vm452, %vm453
    %v455 = vsel %vm454, %v447, %v451
    %v456 = vand.u32 2147483647, %v446
    %vm457 = vcmp.eq.f32.partialorder %v456, 8.507059e+37
    %v458 = vand.u32 %v446, 2147483648
    %v459 = vor.u32 1.1754944e-38, %v458
    %v460 = vsel %vm457, %v459, %v455
    %v461 = vmul.f32 1.0, %v460
    %v462 = vtanh.pop %v442
    %464 = vrot.lane.b32.xlu0 %v275, 32
    %v465 = vpop.permute.xlu0 %464
    %v467 = vmul.f32 %v461, %v465
    %469 = vrot.lane.b32.xlu0 %v462, 64
    %v470 = vpop.permute.xlu0 %469
    %v472 = vmul.f32 %v461, %v470
    %474 = vrot.lane.b32.xlu0 %v472, 32
    %v475 = vpop.permute.xlu0 %474
    %v477 = vadd.f32 %v467, %v475
    %v478 = vtanh.pop %v477
    %480 = vrot.lane.b32.xlu0 %v478, 64
    %v481 = vpop.permute.xlu0 %480
    %v483 = vmul.f32 %v461, %v481
    %485 = vrot.lane.b32.xlu0 %v483, 32
    %v486 = vpop.permute.xlu0 %485
    %vm488 = vcmask 254976
    %489 = vst.msk [vmem:[#allocation2] sm:$0x3] %vm488, %v486
    %491 = vrot.lane.b32.xlu0 %v438, 32
    %v492 = vpop.permute.xlu0 %491
    %v494 = vrot.slane %v483, 6
    %495 = vrot.lane.b32.xlu0 %v494, 64
    %v496 = vpop.permute.xlu0 %495
    %v498 = vsel %vm115, %v492, %v496
    %v500 = vrot.slane %v498, 2
    %v501 = vsel %vm281, %v500, 0
    %503 = vmatpush.msra.mxu0 0.0
    %504 = vmatpush.msra.mxu0 0.0
    %505 = vmatpush.msra.mxu0 0.0
    %506 = vmatpush.msra.mxu0 0.0
    %507 = vmatpush.msra.mxu0 0.0
    %508 = vmatpush.msra.mxu0 0.0
    %509 = vmatpush.msra.mxu0 0.0
    %510 = vmatpush.msra.mxu0 0.0
    %511 = vmatpush.msra.mxu0 %v267
    %512 = vmatpush.msra.mxu0 %v265
    %513 = vmatpush.msra.mxu0 %v263
    %514 = vmatpush.msra.mxu0 %v261
    %515 = vmatpush.msra.mxu0 %v259
    %516 = vmatpush.msra.mxu0 %v257
    %517 = vmatpush.msra.mxu0 %v255
    %518 = vmatpush.msra.mxu0 %v253
    %519 = vmatmul.f32.gmra.mxu0 %v501
    %v520 = vpop.f32.mrf.mxu0
    %v521 = vadd.f32 0.0, %v520
    %522 = vdwg.mxu0
    %523 = vmatpush.msra.mxu0 0.0
    %524 = vmatpush.msra.mxu0 0.0
    %525 = vmatpush.msra.mxu0 0.0
    %526 = vmatpush.msra.mxu0 0.0
    %527 = vmatpush.msra.mxu0 0.0
    %528 = vmatpush.msra.mxu0 0.0
    %529 = vmatpush.msra.mxu0 0.0
    %530 = vmatpush.msra.mxu0 0.0
    %531 = vmatpush.msra.mxu0 %v268
    %532 = vmatpush.msra.mxu0 %v266
    %533 = vmatpush.msra.mxu0 %v264
    %534 = vmatpush.msra.mxu0 %v262
    %535 = vmatpush.msra.mxu0 %v260
    %536 = vmatpush.msra.mxu0 %v258
    %537 = vmatpush.msra.mxu0 %v256
    %538 = vmatpush.msra.mxu0 %v254
    %539 = vmatmul.f32.gmra.mxu0 %v501
    %v540 = vpop.f32.mrf.mxu0
    %v541 = vadd.f32 0.0, %v540
    %542 = vdwg.mxu0
    %v544 = vrot.slane %v521, 4
    %v546 = vadd.f32 %v248, %v544
    %v547 = vxor.u32 %v546, 2147483648
    %v548 = vmul.f32 %v547, 1.442695
    %v549 = vpow.pop %v548
    %v550 = vadd.f32 %v549, 1.0
    %v551 = vrcp.pop %v550
    %v552 = vmul.f32 %v550, %v551
    %v553 = vsub.f32 1.0, %v552
    %v554 = vmul.f32 %v551, %v553
    %v555 = vadd.f32 %v551, %v554
    %vm556 = vweird.f32 %v550
    %vm557 = vweird.f32 %v551
    %vm558 = vmor %vm556, %vm557
    %v559 = vsel %vm558, %v551, %v555
    %v560 = vand.u32 2147483647, %v550
    %vm561 = vcmp.eq.f32.partialorder %v560, 8.507059e+37
    %v562 = vand.u32 %v550, 2147483648
    %v563 = vor.u32 1.1754944e-38, %v562
    %v564 = vsel %vm561, %v563, %v559
    %v565 = vmul.f32 1.0, %v564
    %v566 = vtanh.pop %v546
    %v568 = vrot.slane %v432, 6
    %v570 = vmul.f32 %v565, %v568
    %572 = vrot.lane.b32.xlu0 %v566, 64
    %v573 = vpop.permute.xlu0 %572
    %v575 = vmul.f32 %v565, %v573
    %577 = vrot.lane.b32.xlu0 %v575, 32
    %v578 = vpop.permute.xlu0 %577
    %v580 = vadd.f32 %v570, %v578
    %v581 = vtanh.pop %v580
    %583 = vrot.lane.b32.xlu0 %v581, 64
    %v584 = vpop.permute.xlu0 %583
    %v586 = vmul.f32 %v565, %v584
    %v587 = vadd.f32 %v541, %v440
    %v588 = vxor.u32 %v587, 2147483648
    %v589 = vmul.f32 %v588, 1.442695
    %v590 = vpow.pop %v589
    %v591 = vadd.f32 %v590, 1.0
    %v592 = vrcp.pop %v591
    %v593 = vmul.f32 %v591, %v592
    %v594 = vsub.f32 1.0, %v593
    %v595 = vmul.f32 %v592, %v594
    %v596 = vadd.f32 %v592, %v595
    %vm597 = vweird.f32 %v591
    %vm598 = vweird.f32 %v592
    %vm599 = vmor %vm597, %vm598
    %v600 = vsel %vm599, %v592, %v596
    %v601 = vand.u32 2147483647, %v591
    %vm602 = vcmp.eq.f32.partialorder %v601, 8.507059e+37
    %v603 = vand.u32 %v591, 2147483648
    %v604 = vor.u32 1.1754944e-38, %v603
    %v605 = vsel %vm602, %v604, %v600
    %v606 = vmul.f32 1.0, %v605
    %v607 = vtanh.pop %v587
    %v608 = vmul.f32 %v606, %v477
    %610 = vrot.lane.b32.xlu0 %v607, 64
    %v611 = vpop.permute.xlu0 %610
    %v613 = vmul.f32 %v606, %v611
    %615 = vrot.lane.b32.xlu0 %v613, 32
    %v616 = vpop.permute.xlu0 %615
    %v618 = vadd.f32 %v608, %v616
    %v619 = vtanh.pop %v618
    %621 = vrot.lane.b32.xlu0 %v619, 64
    %v622 = vpop.permute.xlu0 %621
    %v624 = vmul.f32 %v606, %v622
    %626 = vrot.lane.b32.xlu0 %v624, 32
    %v627 = vpop.permute.xlu0 %626
    %629 = vst.msk [vmem:[#allocation2 + $0x2] sm:$0x3] %vm488, %v627
    %631 = vrot.lane.b32.xlu0 %v586, 32
    %v632 = vpop.permute.xlu0 %631
    %v634 = vrot.slane %v624, 4
    %635 = vrot.lane.b32.xlu0 %v634, 64
    %v636 = vpop.permute.xlu0 %635
    %v638 = vsel %vm115, %v632, %v636
    %v640 = vrot.slane %v638, 4
    %v641 = vsel %vm281, %v640, 0
    %643 = vmatpush.msra.mxu0 0.0
    %644 = vmatpush.msra.mxu0 0.0
    %645 = vmatpush.msra.mxu0 0.0
    %646 = vmatpush.msra.mxu0 0.0
    %647 = vmatpush.msra.mxu0 0.0
    %648 = vmatpush.msra.mxu0 0.0
    %649 = vmatpush.msra.mxu0 0.0
    %650 = vmatpush.msra.mxu0 0.0
    %651 = vmatpush.msra.mxu0 %v267
    %652 = vmatpush.msra.mxu0 %v265
    %653 = vmatpush.msra.mxu0 %v263
    %654 = vmatpush.msra.mxu0 %v261
    %655 = vmatpush.msra.mxu0 %v259
    %656 = vmatpush.msra.mxu0 %v257
    %657 = vmatpush.msra.mxu0 %v255
    %658 = vmatpush.msra.mxu0 %v253
    %659 = vmatmul.f32.gmra.mxu0 %v641
    %v660 = vpop.f32.mrf.mxu0
    %v661 = vadd.f32 0.0, %v660
    %662 = vdwg.mxu0
    %663 = vmatpush.msra.mxu0 0.0
    %664 = vmatpush.msra.mxu0 0.0
    %665 = vmatpush.msra.mxu0 0.0
    %666 = vmatpush.msra.mxu0 0.0
    %667 = vmatpush.msra.mxu0 0.0
    %668 = vmatpush.msra.mxu0 0.0
    %669 = vmatpush.msra.mxu0 0.0
    %670 = vmatpush.msra.mxu0 0.0
    %671 = vmatpush.msra.mxu0 %v268
    %672 = vmatpush.msra.mxu0 %v266
    %673 = vmatpush.msra.mxu0 %v264
    %674 = vmatpush.msra.mxu0 %v262
    %675 = vmatpush.msra.mxu0 %v260
    %676 = vmatpush.msra.mxu0 %v258
    %677 = vmatpush.msra.mxu0 %v256
    %678 = vmatpush.msra.mxu0 %v254
    %679 = vmatmul.f32.gmra.mxu0 %v641
    %v680 = vpop.f32.mrf.mxu0
    %v681 = vadd.f32 0.0, %v680
    %682 = vdwg.mxu0
    %v684 = vrot.slane %v661, 2
    %v686 = vadd.f32 %v248, %v684
    %v687 = vxor.u32 %v686, 2147483648
    %v688 = vmul.f32 %v687, 1.442695
    %v689 = vpow.pop %v688
    %v690 = vadd.f32 %v689, 1.0
    %v691 = vrcp.pop %v690
    %v692 = vmul.f32 %v690, %v691
    %v693 = vsub.f32 1.0, %v692
    %v694 = vmul.f32 %v691, %v693
    %v695 = vadd.f32 %v691, %v694
    %vm696 = vweird.f32 %v690
    %vm697 = vweird.f32 %v691
    %vm698 = vmor %vm696, %vm697
    %v699 = vsel %vm698, %v691, %v695
    %v700 = vand.u32 2147483647, %v690
    %vm701 = vcmp.eq.f32.partialorder %v700, 8.507059e+37
    %v702 = vand.u32 %v690, 2147483648
    %v703 = vor.u32 1.1754944e-38, %v702
    %v704 = vsel %vm701, %v703, %v699
    %v705 = vmul.f32 1.0, %v704
    %v706 = vtanh.pop %v686
    %v708 = vrot.slane %v580, 6
    %v710 = vmul.f32 %v705, %v708
    %712 = vrot.lane.b32.xlu0 %v706, 64
    %v713 = vpop.permute.xlu0 %712
    %v715 = vmul.f32 %v705, %v713
    %717 = vrot.lane.b32.xlu0 %v715, 32
    %v718 = vpop.permute.xlu0 %717
    %v720 = vadd.f32 %v710, %v718
    %v721 = vtanh.pop %v720
    %723 = vrot.lane.b32.xlu0 %v721, 64
    %v724 = vpop.permute.xlu0 %723
    %v726 = vmul.f32 %v705, %v724
    %v727 = vadd.f32 %v681, %v440
    %v728 = vxor.u32 %v727, 2147483648
    %v729 = vmul.f32 %v728, 1.442695
    %v730 = vpow.pop %v729
    %v731 = vadd.f32 %v730, 1.0
    %v732 = vrcp.pop %v731
    %v733 = vmul.f32 %v731, %v732
    %v734 = vsub.f32 1.0, %v733
    %v735 = vmul.f32 %v732, %v734
    %v736 = vadd.f32 %v732, %v735
    %vm737 = vweird.f32 %v731
    %vm738 = vweird.f32 %v732
    %vm739 = vmor %vm737, %vm738
    %v740 = vsel %vm739, %v732, %v736
    %v741 = vand.u32 2147483647, %v731
    %vm742 = vcmp.eq.f32.partialorder %v741, 8.507059e+37
    %v743 = vand.u32 %v731, 2147483648
    %v744 = vor.u32 1.1754944e-38, %v743
    %v745 = vsel %vm742, %v744, %v740
    %v746 = vmul.f32 1.0, %v745
    %v747 = vtanh.pop %v727
    %v748 = vmul.f32 %v746, %v618
    %750 = vrot.lane.b32.xlu0 %v747, 64
    %v751 = vpop.permute.xlu0 %750
    %v753 = vmul.f32 %v746, %v751
    %755 = vrot.lane.b32.xlu0 %v753, 32
    %v756 = vpop.permute.xlu0 %755
    %v758 = vadd.f32 %v748, %v756
    %v759 = vtanh.pop %v758
    %761 = vrot.lane.b32.xlu0 %v759, 64
    %v762 = vpop.permute.xlu0 %761
    %v764 = vmul.f32 %v746, %v762
    %766 = vrot.lane.b32.xlu0 %v764, 32
    %v767 = vpop.permute.xlu0 %766
    %769 = vst.msk [vmem:[#allocation2 + $0x4] sm:$0x3] %vm488, %v767
    %771 = vrot.lane.b32.xlu0 %v726, 32
    %v772 = vpop.permute.xlu0 %771
    %v774 = vrot.slane %v764, 2
    %775 = vrot.lane.b32.xlu0 %v774, 64
    %v776 = vpop.permute.xlu0 %775
    %v778 = vsel %vm115, %v772, %v776
    %v780 = vrot.slane %v778, 6
    %v781 = vsel %vm281, %v780, 0
    %783 = vmatpush.msra.mxu0 0.0
    %784 = vmatpush.msra.mxu0 0.0
    %785 = vmatpush.msra.mxu0 0.0
    %786 = vmatpush.msra.mxu0 0.0
    %787 = vmatpush.msra.mxu0 0.0
    %788 = vmatpush.msra.mxu0 0.0
    %789 = vmatpush.msra.mxu0 0.0
    %790 = vmatpush.msra.mxu0 0.0
    %791 = vmatpush.msra.mxu0 %v267
    %792 = vmatpush.msra.mxu0 %v265
    %793 = vmatpush.msra.mxu0 %v263
    %794 = vmatpush.msra.mxu0 %v261
    %795 = vmatpush.msra.mxu0 %v259
    %796 = vmatpush.msra.mxu0 %v257
    %797 = vmatpush.msra.mxu0 %v255
    %798 = vmatpush.msra.mxu0 %v253
    %799 = vmatmul.f32.gmra.mxu0 %v781
    %v800 = vpop.f32.mrf.mxu0
    %v801 = vadd.f32 0.0, %v800
    %802 = vdwg.mxu0
    %803 = vmatpush.msra.mxu0 0.0
    %804 = vmatpush.msra.mxu0 0.0
    %805 = vmatpush.msra.mxu0 0.0
    %806 = vmatpush.msra.mxu0 0.0
    %807 = vmatpush.msra.mxu0 0.0
    %808 = vmatpush.msra.mxu0 0.0
    %809 = vmatpush.msra.mxu0 0.0
    %810 = vmatpush.msra.mxu0 0.0
    %811 = vmatpush.msra.mxu0 %v268
    %812 = vmatpush.msra.mxu0 %v266
    %813 = vmatpush.msra.mxu0 %v264
    %814 = vmatpush.msra.mxu0 %v262
    %815 = vmatpush.msra.mxu0 %v260
    %816 = vmatpush.msra.mxu0 %v258
    %817 = vmatpush.msra.mxu0 %v256
    %818 = vmatpush.msra.mxu0 %v254
    %819 = vmatmul.f32.gmra.mxu0 %v781
    %v820 = vpop.f32.mrf.mxu0
    %v821 = vadd.f32 0.0, %v820
    %822 = vdwg.mxu0
    %v823 = vadd.f32 %v251, %v801
    %v824 = vxor.u32 %v823, 2147483648
    %v825 = vmul.f32 %v824, 1.442695
    %v826 = vpow.pop %v825
    %v827 = vadd.f32 %v826, 1.0
    %v828 = vrcp.pop %v827
    %v829 = vmul.f32 %v827, %v828
    %v830 = vsub.f32 1.0, %v829
    %v831 = vmul.f32 %v828, %v830
    %v832 = vadd.f32 %v828, %v831
    %vm833 = vweird.f32 %v827
    %vm834 = vweird.f32 %v828
    %vm835 = vmor %vm833, %vm834
    %v836 = vsel %vm835, %v828, %v832
    %v837 = vand.u32 2147483647, %v827
    %vm838 = vcmp.eq.f32.partialorder %v837, 8.507059e+37
    %v839 = vand.u32 %v827, 2147483648
    %v840 = vor.u32 1.1754944e-38, %v839
    %v841 = vsel %vm838, %v840, %v836
    %v842 = vmul.f32 1.0, %v841
    %v843 = vtanh.pop %v823
    %v845 = vrot.slane %v720, 6
    %v847 = vmul.f32 %v842, %v845
    %849 = vrot.lane.b32.xlu0 %v843, 64
    %v850 = vpop.permute.xlu0 %849
    %v852 = vmul.f32 %v842, %v850
    %854 = vrot.lane.b32.xlu0 %v852, 32
    %v855 = vpop.permute.xlu0 %854
    %v857 = vadd.f32 %v847, %v855
    %v858 = vtanh.pop %v857
    %860 = vrot.lane.b32.xlu0 %v858, 64
    %v861 = vpop.permute.xlu0 %860
    %v863 = vmul.f32 %v842, %v861
    %v864 = vadd.f32 %v821, %v440
    %v865 = vxor.u32 %v864, 2147483648
    %v866 = vmul.f32 %v865, 1.442695
    %v867 = vpow.pop %v866
    %v868 = vadd.f32 %v867, 1.0
    %v869 = vrcp.pop %v868
    %v870 = vmul.f32 %v868, %v869
    %v871 = vsub.f32 1.0, %v870
    %v872 = vmul.f32 %v869, %v871
    %v873 = vadd.f32 %v869, %v872
    %vm874 = vweird.f32 %v868
    %vm875 = vweird.f32 %v869
    %vm876 = vmor %vm874, %vm875
    %v877 = vsel %vm876, %v869, %v873
    %v878 = vand.u32 2147483647, %v868
    %vm879 = vcmp.eq.f32.partialorder %v878, 8.507059e+37
    %v880 = vand.u32 %v868, 2147483648
    %v881 = vor.u32 1.1754944e-38, %v880
    %v882 = vsel %vm879, %v881, %v877
    %v883 = vmul.f32 1.0, %v882
    %v884 = vtanh.pop %v864
    %v885 = vmul.f32 %v883, %v758
    %887 = vrot.lane.b32.xlu0 %v884, 64
    %v888 = vpop.permute.xlu0 %887
    %v890 = vmul.f32 %v883, %v888
    %892 = vrot.lane.b32.xlu0 %v890, 32
    %v893 = vpop.permute.xlu0 %892
    %v895 = vadd.f32 %v885, %v893
    %v896 = vtanh.pop %v895
    %898 = vrot.lane.b32.xlu0 %v896, 64
    %v899 = vpop.permute.xlu0 %898
    %v901 = vmul.f32 %v883, %v899
    %903 = vrot.lane.b32.xlu0 %v901, 32
    %v904 = vpop.permute.xlu0 %903
    %906 = vst.msk [vmem:[#allocation2 + $0x6] sm:$0x3] %vm488, %v904
    %908 = vrot.lane.b32.xlu0 %v863, 32
    %v909 = vpop.permute.xlu0 %908
    %911 = vrot.lane.b32.xlu0 %v901, 64
    %v912 = vpop.permute.xlu0 %911
    %v914 = vsel %vm115, %v909, %v912
    %v916 = vsel %vm281, %v914, 0
    %918 = vmatpush.msra.mxu0 0.0
    %919 = vmatpush.msra.mxu0 0.0
    %920 = vmatpush.msra.mxu0 0.0
    %921 = vmatpush.msra.mxu0 0.0
    %922 = vmatpush.msra.mxu0 0.0
    %923 = vmatpush.msra.mxu0 0.0
    %924 = vmatpush.msra.mxu0 0.0
    %925 = vmatpush.msra.mxu0 0.0
    %926 = vmatpush.msra.mxu0 %v267
    %927 = vmatpush.msra.mxu0 %v265
    %928 = vmatpush.msra.mxu0 %v263
    %929 = vmatpush.msra.mxu0 %v261
    %930 = vmatpush.msra.mxu0 %v259
    %931 = vmatpush.msra.mxu0 %v257
    %932 = vmatpush.msra.mxu0 %v255
    %933 = vmatpush.msra.mxu0 %v253
    %934 = vmatmul.f32.gmra.mxu0 %v916
    %v935 = vpop.f32.mrf.mxu0
    %v936 = vadd.f32 0.0, %v935
    %937 = vdwg.mxu0
    %938 = vmatpush.msra.mxu0 0.0
    %939 = vmatpush.msra.mxu0 0.0
    %940 = vmatpush.msra.mxu0 0.0
    %941 = vmatpush.msra.mxu0 0.0
    %942 = vmatpush.msra.mxu0 0.0
    %943 = vmatpush.msra.mxu0 0.0
    %944 = vmatpush.msra.mxu0 0.0
    %945 = vmatpush.msra.mxu0 0.0
    %946 = vmatpush.msra.mxu0 %v268
    %947 = vmatpush.msra.mxu0 %v266
    %948 = vmatpush.msra.mxu0 %v264
    %949 = vmatpush.msra.mxu0 %v262
    %950 = vmatpush.msra.mxu0 %v260
    %951 = vmatpush.msra.mxu0 %v258
    %952 = vmatpush.msra.mxu0 %v256
    %953 = vmatpush.msra.mxu0 %v254
    %954 = vmatmul.f32.gmra.mxu0 %v916
    %v955 = vpop.f32.mrf.mxu0
    %v956 = vadd.f32 0.0, %v955
    %957 = vdwg.mxu0
    %v959 = vrot.slane %v936, 6
    %v961 = vadd.f32 %v251, %v959
    %v962 = vxor.u32 %v961, 2147483648
    %v963 = vmul.f32 %v962, 1.442695
    %v964 = vpow.pop %v963
    %v965 = vadd.f32 %v964, 1.0
    %v966 = vrcp.pop %v965
    %v967 = vmul.f32 %v965, %v966
    %v968 = vsub.f32 1.0, %v967
    %v969 = vmul.f32 %v966, %v968
    %v970 = vadd.f32 %v966, %v969
    %vm971 = vweird.f32 %v965
    %vm972 = vweird.f32 %v966
    %vm973 = vmor %vm971, %vm972
    %v974 = vsel %vm973, %v966, %v970
    %v975 = vand.u32 2147483647, %v965
    %vm976 = vcmp.eq.f32.partialorder %v975, 8.507059e+37
    %v977 = vand.u32 %v965, 2147483648
    %v978 = vor.u32 1.1754944e-38, %v977
    %v979 = vsel %vm976, %v978, %v974
    %v980 = vmul.f32 1.0, %v979
    %v981 = vtanh.pop %v961
    %v983 = vrot.slane %v857, 6
    %v985 = vmul.f32 %v980, %v983
    %987 = vrot.lane.b32.xlu0 %v981, 64
    %v988 = vpop.permute.xlu0 %987
    %v990 = vmul.f32 %v980, %v988
    %992 = vrot.lane.b32.xlu0 %v990, 32
    %v993 = vpop.permute.xlu0 %992
    %v995 = vadd.f32 %v985, %v993
    %v996 = vtanh.pop %v995
    %998 = vrot.lane.b32.xlu0 %v996, 64
    %v999 = vpop.permute.xlu0 %998
    %v1001 = vmul.f32 %v980, %v999
    %v1002 = vadd.f32 %v956, %v440
    %v1003 = vxor.u32 %v1002, 2147483648
    %v1004 = vmul.f32 %v1003, 1.442695
    %v1005 = vpow.pop %v1004
    %v1006 = vadd.f32 %v1005, 1.0
    %v1007 = vrcp.pop %v1006
    %v1008 = vmul.f32 %v1006, %v1007
    %v1009 = vsub.f32 1.0, %v1008
    %v1010 = vmul.f32 %v1007, %v1009
    %v1011 = vadd.f32 %v1007, %v1010
    %vm1012 = vweird.f32 %v1006
    %vm1013 = vweird.f32 %v1007
    %vm1014 = vmor %vm1012, %vm1013
    %v1015 = vsel %vm1014, %v1007, %v1011
    %v1016 = vand.u32 2147483647, %v1006
    %vm1017 = vcmp.eq.f32.partialorder %v1016, 8.507059e+37
    %v1018 = vand.u32 %v1006, 2147483648
    %v1019 = vor.u32 1.1754944e-38, %v1018
    %v1020 = vsel %vm1017, %v1019, %v1015
    %v1021 = vmul.f32 1.0, %v1020
    %v1022 = vtanh.pop %v1002
    %v1023 = vmul.f32 %v1021, %v895
    %1025 = vrot.lane.b32.xlu0 %v1022, 64
    %v1026 = vpop.permute.xlu0 %1025
    %v1028 = vmul.f32 %v1021, %v1026
    %1030 = vrot.lane.b32.xlu0 %v1028, 32
    %v1031 = vpop.permute.xlu0 %1030
    %v1033 = vadd.f32 %v1023, %v1031
    %v1034 = vtanh.pop %v1033
    %1036 = vrot.lane.b32.xlu0 %v1034, 64
    %v1037 = vpop.permute.xlu0 %1036
    %v1039 = vmul.f32 %v1021, %v1037
    %1041 = vrot.lane.b32.xlu0 %v1039, 32
    %v1042 = vpop.permute.xlu0 %1041
    %1044 = vst.msk [vmem:[#allocation2 + $0x8] sm:$0x3] %vm488, %v1042
    %1046 = vrot.lane.b32.xlu0 %v1001, 32
    %v1047 = vpop.permute.xlu0 %1046
    %v1049 = vrot.slane %v1039, 6
    %1050 = vrot.lane.b32.xlu0 %v1049, 64
    %v1051 = vpop.permute.xlu0 %1050
    %v1053 = vsel %vm115, %v1047, %v1051
    %v1055 = vrot.slane %v1053, 2
    %v1056 = vsel %vm281, %v1055, 0
    %1058 = vmatpush.msra.mxu0 0.0
    %1059 = vmatpush.msra.mxu0 0.0
    %1060 = vmatpush.msra.mxu0 0.0
    %1061 = vmatpush.msra.mxu0 0.0
    %1062 = vmatpush.msra.mxu0 0.0
    %1063 = vmatpush.msra.mxu0 0.0
    %1064 = vmatpush.msra.mxu0 0.0
    %1065 = vmatpush.msra.mxu0 0.0
    %1066 = vmatpush.msra.mxu0 %v267
    %1067 = vmatpush.msra.mxu0 %v265
    %1068 = vmatpush.msra.mxu0 %v263
    %1069 = vmatpush.msra.mxu0 %v261
    %1070 = vmatpush.msra.mxu0 %v259
    %1071 = vmatpush.msra.mxu0 %v257
    %1072 = vmatpush.msra.mxu0 %v255
    %1073 = vmatpush.msra.mxu0 %v253
    %1074 = vmatmul.f32.gmra.mxu0 %v1056
    %v1075 = vpop.f32.mrf.mxu0
    %v1076 = vadd.f32 0.0, %v1075
    %1077 = vdwg.mxu0
    %1078 = vmatpush.msra.mxu0 0.0
    %1079 = vmatpush.msra.mxu0 0.0
    %1080 = vmatpush.msra.mxu0 0.0
    %1081 = vmatpush.msra.mxu0 0.0
    %1082 = vmatpush.msra.mxu0 0.0
    %1083 = vmatpush.msra.mxu0 0.0
    %1084 = vmatpush.msra.mxu0 0.0
    %1085 = vmatpush.msra.mxu0 0.0
    %1086 = vmatpush.msra.mxu0 %v268
    %1087 = vmatpush.msra.mxu0 %v266
    %1088 = vmatpush.msra.mxu0 %v264
    %1089 = vmatpush.msra.mxu0 %v262
    %1090 = vmatpush.msra.mxu0 %v260
    %1091 = vmatpush.msra.mxu0 %v258
    %1092 = vmatpush.msra.mxu0 %v256
    %1093 = vmatpush.msra.mxu0 %v254
    %1094 = vmatmul.f32.gmra.mxu0 %v1056
    %v1095 = vpop.f32.mrf.mxu0
    %v1096 = vadd.f32 0.0, %v1095
    %1097 = vdwg.mxu0
    %v1099 = vrot.slane %v1076, 4
    %v1101 = vadd.f32 %v251, %v1099
    %v1102 = vxor.u32 %v1101, 2147483648
    %v1103 = vmul.f32 %v1102, 1.442695
    %v1104 = vpow.pop %v1103
    %v1105 = vadd.f32 %v1104, 1.0
    %v1106 = vrcp.pop %v1105
    %v1107 = vmul.f32 %v1105, %v1106
    %v1108 = vsub.f32 1.0, %v1107
    %v1109 = vmul.f32 %v1106, %v1108
    %v1110 = vadd.f32 %v1106, %v1109
    %vm1111 = vweird.f32 %v1105
    %vm1112 = vweird.f32 %v1106
    %vm1113 = vmor %vm1111, %vm1112
    %v1114 = vsel %vm1113, %v1106, %v1110
    %v1115 = vand.u32 2147483647, %v1105
    %vm1116 = vcmp.eq.f32.partialorder %v1115, 8.507059e+37
    %v1117 = vand.u32 %v1105, 2147483648
    %v1118 = vor.u32 1.1754944e-38, %v1117
    %v1119 = vsel %vm1116, %v1118, %v1114
    %v1120 = vmul.f32 1.0, %v1119
    %v1121 = vtanh.pop %v1101
    %v1123 = vrot.slane %v995, 6
    %v1125 = vmul.f32 %v1120, %v1123
    %1127 = vrot.lane.b32.xlu0 %v1121, 64
    %v1128 = vpop.permute.xlu0 %1127
    %v1130 = vmul.f32 %v1120, %v1128
    %1132 = vrot.lane.b32.xlu0 %v1130, 32
    %v1133 = vpop.permute.xlu0 %1132
    %v1135 = vadd.f32 %v1125, %v1133
    %v1136 = vtanh.pop %v1135
    %1138 = vrot.lane.b32.xlu0 %v1136, 64
    %v1139 = vpop.permute.xlu0 %1138
    %v1141 = vmul.f32 %v1120, %v1139
    %v1142 = vadd.f32 %v1096, %v440
    %v1143 = vxor.u32 %v1142, 2147483648
    %v1144 = vmul.f32 %v1143, 1.442695
    %v1145 = vpow.pop %v1144
    %v1146 = vadd.f32 %v1145, 1.0
    %v1147 = vrcp.pop %v1146
    %v1148 = vmul.f32 %v1146, %v1147
    %v1149 = vsub.f32 1.0, %v1148
    %v1150 = vmul.f32 %v1147, %v1149
    %v1151 = vadd.f32 %v1147, %v1150
    %vm1152 = vweird.f32 %v1146
    %vm1153 = vweird.f32 %v1147
    %vm1154 = vmor %vm1152, %vm1153
    %v1155 = vsel %vm1154, %v1147, %v1151
    %v1156 = vand.u32 2147483647, %v1146
    %vm1157 = vcmp.eq.f32.partialorder %v1156, 8.507059e+37
    %v1158 = vand.u32 %v1146, 2147483648
    %v1159 = vor.u32 1.1754944e-38, %v1158
    %v1160 = vsel %vm1157, %v1159, %v1155
    %v1161 = vmul.f32 1.0, %v1160
    %v1162 = vtanh.pop %v1142
    %v1163 = vmul.f32 %v1161, %v1033
    %1165 = vrot.lane.b32.xlu0 %v1162, 64
    %v1166 = vpop.permute.xlu0 %1165
    %v1168 = vmul.f32 %v1161, %v1166
    %1170 = vrot.lane.b32.xlu0 %v1168, 32
    %v1171 = vpop.permute.xlu0 %1170
    %v1173 = vadd.f32 %v1163, %v1171
    %v1174 = vtanh.pop %v1173
    %1176 = vrot.lane.b32.xlu0 %v1174, 64
    %v1177 = vpop.permute.xlu0 %1176
    %v1179 = vmul.f32 %v1161, %v1177
    %1181 = vrot.lane.b32.xlu0 %v1179, 32
    %v1182 = vpop.permute.xlu0 %1181
    %1184 = vst.msk [vmem:[#allocation2 + $0xa] sm:$0x3] %vm488, %v1182
    %1186 = vrot.lane.b32.xlu0 %v1141, 32
    %v1187 = vpop.permute.xlu0 %1186
    %v1189 = vrot.slane %v1179, 4
    %1190 = vrot.lane.b32.xlu0 %v1189, 64
    %v1191 = vpop.permute.xlu0 %1190
    %v1193 = vsel %vm115, %v1187, %v1191
    %v1195 = vrot.slane %v1193, 4
    %v1196 = vsel %vm281, %v1195, 0
    %1198 = vmatpush.msra.mxu0 0.0
    %1199 = vmatpush.msra.mxu0 0.0
    %1200 = vmatpush.msra.mxu0 0.0
    %1201 = vmatpush.msra.mxu0 0.0
    %1202 = vmatpush.msra.mxu0 0.0
    %1203 = vmatpush.msra.mxu0 0.0
    %1204 = vmatpush.msra.mxu0 0.0
    %1205 = vmatpush.msra.mxu0 0.0
    %1206 = vmatpush.msra.mxu0 %v267
    %1207 = vmatpush.msra.mxu0 %v265
    %1208 = vmatpush.msra.mxu0 %v263
    %1209 = vmatpush.msra.mxu0 %v261
    %1210 = vmatpush.msra.mxu0 %v259
    %1211 = vmatpush.msra.mxu0 %v257
    %1212 = vmatpush.msra.mxu0 %v255
    %1213 = vmatpush.msra.mxu0 %v253
    %1214 = vmatmul.f32.gmra.mxu0 %v1196
    %v1215 = vpop.f32.mrf.mxu0
    %v1216 = vadd.f32 0.0, %v1215
    %1217 = vdwg.mxu0
    %1218 = vmatpush.msra.mxu0 0.0
    %1219 = vmatpush.msra.mxu0 0.0
    %1220 = vmatpush.msra.mxu0 0.0
    %1221 = vmatpush.msra.mxu0 0.0
    %1222 = vmatpush.msra.mxu0 0.0
    %1223 = vmatpush.msra.mxu0 0.0
    %1224 = vmatpush.msra.mxu0 0.0
    %1225 = vmatpush.msra.mxu0 0.0
    %1226 = vmatpush.msra.mxu0 %v268
    %1227 = vmatpush.msra.mxu0 %v266
    %1228 = vmatpush.msra.mxu0 %v264
    %1229 = vmatpush.msra.mxu0 %v262
    %1230 = vmatpush.msra.mxu0 %v260
    %1231 = vmatpush.msra.mxu0 %v258
    %1232 = vmatpush.msra.mxu0 %v256
    %1233 = vmatpush.msra.mxu0 %v254
    %1234 = vmatmul.f32.gmra.mxu0 %v1196
    %v1235 = vpop.f32.mrf.mxu0
    %v1236 = vadd.f32 0.0, %v1235
    %1237 = vdwg.mxu0
    %v1239 = vrot.slane %v1216, 2
    %v1241 = vadd.f32 %v251, %v1239
    %v1242 = vxor.u32 %v1241, 2147483648
    %v1243 = vmul.f32 %v1242, 1.442695
    %v1244 = vpow.pop %v1243
    %v1245 = vadd.f32 %v1244, 1.0
    %v1246 = vrcp.pop %v1245
    %v1247 = vmul.f32 %v1245, %v1246
    %v1248 = vsub.f32 1.0, %v1247
    %v1249 = vmul.f32 %v1246, %v1248
    %v1250 = vadd.f32 %v1246, %v1249
    %vm1251 = vweird.f32 %v1245
    %vm1252 = vweird.f32 %v1246
    %vm1253 = vmor %vm1251, %vm1252
    %v1254 = vsel %vm1253, %v1246, %v1250
    %v1255 = vand.u32 2147483647, %v1245
    %vm1256 = vcmp.eq.f32.partialorder %v1255, 8.507059e+37
    %v1257 = vand.u32 %v1245, 2147483648
    %v1258 = vor.u32 1.1754944e-38, %v1257
    %v1259 = vsel %vm1256, %v1258, %v1254
    %v1260 = vmul.f32 1.0, %v1259
    %v1261 = vtanh.pop %v1241
    %v1263 = vrot.slane %v1135, 6
    %v1265 = vmul.f32 %v1260, %v1263
    %1267 = vrot.lane.b32.xlu0 %v1261, 64
    %v1268 = vpop.permute.xlu0 %1267
    %v1270 = vmul.f32 %v1260, %v1268
    %1272 = vrot.lane.b32.xlu0 %v1270, 32
    %v1273 = vpop.permute.xlu0 %1272
    %v1275 = vadd.f32 %v1265, %v1273
    %v1276 = vtanh.pop %v1275
    %1278 = vrot.lane.b32.xlu0 %v1276, 64
    %v1279 = vpop.permute.xlu0 %1278
    %v1281 = vmul.f32 %v1260, %v1279
    %v1282 = vadd.f32 %v1236, %v440
    %v1283 = vxor.u32 %v1282, 2147483648
    %v1284 = vmul.f32 %v1283, 1.442695
    %v1285 = vpow.pop %v1284
    %v1286 = vadd.f32 %v1285, 1.0
    %v1287 = vrcp.pop %v1286
    %v1288 = vmul.f32 %v1286, %v1287
    %v1289 = vsub.f32 1.0, %v1288
    %v1290 = vmul.f32 %v1287, %v1289
    %v1291 = vadd.f32 %v1287, %v1290
    %vm1292 = vweird.f32 %v1286
    %vm1293 = vweird.f32 %v1287
    %vm1294 = vmor %vm1292, %vm1293
    %v1295 = vsel %vm1294, %v1287, %v1291
    %v1296 = vand.u32 2147483647, %v1286
    %vm1297 = vcmp.eq.f32.partialorder %v1296, 8.507059e+37
    %v1298 = vand.u32 %v1286, 2147483648
    %v1299 = vor.u32 1.1754944e-38, %v1298
    %v1300 = vsel %vm1297, %v1299, %v1295
    %v1301 = vmul.f32 1.0, %v1300
    %v1302 = vtanh.pop %v1282
    %v1303 = vmul.f32 %v1301, %v1173
    %1305 = vrot.lane.b32.xlu0 %v1302, 64
    %v1306 = vpop.permute.xlu0 %1305
    %v1308 = vmul.f32 %v1301, %v1306
    %1310 = vrot.lane.b32.xlu0 %v1308, 32
    %v1311 = vpop.permute.xlu0 %1310
    %v1313 = vadd.f32 %v1303, %v1311
    %v1314 = vtanh.pop %v1313
    %1316 = vrot.lane.b32.xlu0 %v1314, 64
    %v1317 = vpop.permute.xlu0 %1316
    %v1319 = vmul.f32 %v1301, %v1317
    %1321 = vrot.lane.b32.xlu0 %v1319, 32
    %v1322 = vpop.permute.xlu0 %1321
    %1324 = vst.msk [vmem:[#allocation2 + $0xc] sm:$0x3] %vm488, %v1322
    %1326 = vrot.lane.b32.xlu0 %v1281, 32
    %v1327 = vpop.permute.xlu0 %1326
    %v1329 = vrot.slane %v1319, 2
    %1330 = vrot.lane.b32.xlu0 %v1329, 64
    %v1331 = vpop.permute.xlu0 %1330
    %v1333 = vsel %vm115, %v1327, %v1331
    %v1335 = vrot.slane %v1333, 6
    %v1336 = vsel %vm281, %v1335, 0
    %1338 = vmatpush.msra.mxu0 0.0
    %1339 = vmatpush.msra.mxu0 0.0
    %1340 = vmatpush.msra.mxu0 0.0
    %1341 = vmatpush.msra.mxu0 0.0
    %1342 = vmatpush.msra.mxu0 0.0
    %1343 = vmatpush.msra.mxu0 0.0
    %1344 = vmatpush.msra.mxu0 0.0
    %1345 = vmatpush.msra.mxu0 0.0
    %1346 = vmatpush.msra.mxu0 %v268
    %1347 = vmatpush.msra.mxu0 %v266
    %1348 = vmatpush.msra.mxu0 %v264
    %1349 = vmatpush.msra.mxu0 %v262
    %1350 = vmatpush.msra.mxu0 %v260
    %1351 = vmatpush.msra.mxu0 %v258
    %1352 = vmatpush.msra.mxu0 %v256
    %1353 = vmatpush.msra.mxu0 %v254
    %1354 = vmatmul.f32.gmra.mxu0 %v1336
    %v1355 = vpop.f32.mrf.mxu0
    %v1356 = vadd.f32 0.0, %v1355
    %1357 = vdwg.mxu0
    %v1358 = vadd.f32 %v1356, %v440
    %v1359 = vxor.u32 %v1358, 2147483648
    %v1360 = vmul.f32 %v1359, 1.442695
    %v1361 = vpow.pop %v1360
    %v1362 = vadd.f32 %v1361, 1.0
    %v1363 = vrcp.pop %v1362
    %v1364 = vmul.f32 %v1362, %v1363
    %v1365 = vsub.f32 1.0, %v1364
    %v1366 = vmul.f32 %v1363, %v1365
    %v1367 = vadd.f32 %v1363, %v1366
    %vm1368 = vweird.f32 %v1362
    %vm1369 = vweird.f32 %v1363
    %vm1370 = vmor %vm1368, %vm1369
    %v1371 = vsel %vm1370, %v1363, %v1367
    %v1372 = vand.u32 2147483647, %v1362
    %vm1373 = vcmp.eq.f32.partialorder %v1372, 8.507059e+37
    %v1374 = vand.u32 %v1362, 2147483648
    %v1375 = vor.u32 1.1754944e-38, %v1374
    %v1376 = vsel %vm1373, %v1375, %v1371
    %v1377 = vmul.f32 1.0, %v1376
    %v1378 = vtanh.pop %v1358
    %v1379 = vmul.f32 %v1377, %v1313
    %1381 = vrot.lane.b32.xlu0 %v1378, 64
    %v1382 = vpop.permute.xlu0 %1381
    %v1384 = vmul.f32 %v1377, %v1382
    %1386 = vrot.lane.b32.xlu0 %v1384, 32
    %v1387 = vpop.permute.xlu0 %1386
    %v1389 = vadd.f32 %v1379, %v1387
    %v1390 = vtanh.pop %v1389
    %1392 = vrot.lane.b32.xlu0 %v1390, 64
    %v1393 = vpop.permute.xlu0 %1392
    %v1395 = vmul.f32 %v1377, %v1393
    %1397 = vrot.lane.b32.xlu0 %v1395, 32
    %v1398 = vpop.permute.xlu0 %1397
    %1400 = vst.msk [vmem:[#allocation2 + $0xe] sm:$0x3] %vm488, %v1398
    %vm1401 = vcmask 261126
    %1402 = vst.msk [vmem:[#allocation9 - $0x6] sm:$0xc0] %vm1401, %v1327
    %1404 = vrot.lane.b32.xlu0 %v1275, 96
    %v1405 = vpop.permute.xlu0 %1404
    %1407 = vst.msk [vmem:[#allocation10 - $0x6] sm:$0xc0] %vm1401, %v1405
    %s1408 = scalar_lea.vmem [#allocation9], 2
    %1409 = vst.msk [vmem:[%s1408] sm:$0x3] %vm488, %v1398
    %1411 = vrot.lane.b32.xlu0 %v1389, 96
    %v1412 = vpop.permute.xlu0 %1411
    %s1414 = scalar_lea.vmem [#allocation10], 2
    %1415 = vst.msk [vmem:[%s1414] sm:$0x3] %vm488, %v1412
    %v1416 = vld [vmem:[#allocation2] sm:$0xff]
    %v1417 = vld [vmem:[#allocation2 + $0x8] sm:$0xff]
    %v1418 = vld [vmem:[%s11] sm:$0x1]
    %v1419 = vld [vmem:[%s12] sm:$0x1]
    %v1420 = vsel %vm115, %v1416, 0.0
    %1421 = vadd.xlane.f32.xlu0 %v1420
    %v1422 = vpop.xlane.xlu0 %1421
    %v1423 = vsel %vm115, %v1417, 0.0
    %1424 = vadd.xlane.f32.xlu0 %v1423
    %v1425 = vpop.xlane.xlu0 %1424
    %v1426 = vmul.f32 %v1422, %v128
    %v1427 = vmul.f32 %v1425, %v128
    %v1428 = vsub.f32 %v1416, %v1426
    %v1429 = vsub.f32 %v1417, %v1427
    %v1430 = vmul.f32 %v1428, %v1428
    %v1431 = vmul.f32 %v1429, %v1429
    %v1432 = vsel %vm115, %v1430, 0.0
    %1433 = vadd.xlane.f32.xlu0 %v1432
    %v1434 = vpop.xlane.xlu0 %1433
    %v1435 = vsel %vm115, %v1431, 0.0
    %1436 = vadd.xlane.f32.xlu0 %v1435
    %v1437 = vpop.xlane.xlu0 %1436
    %v1438 = vmul.f32 %v1434, %v147
    %v1439 = vmul.f32 %v1437, %v147
    %v1440 = vrsqrt.pop %v1438
    %v1441 = vmul.f32 %v1440, %v1438
    %v1442 = vmul.f32 %v1441, %v1440
    %v1443 = vmul.f32 0.5, %v1442
    %v1444 = vsub.f32 1.5, %v1443
    %v1445 = vmul.f32 %v1440, %v1444
    %v1446 = vmul.f32 %v1438, %v1445
    %vm1447 = vcmp.eq.f32.partialorder %v1438, inf
    %v1448 = vsel %vm1447, %v1438, %v1446
    %vm1449 = vcmp.eq.f32.partialorder %v1438, 0.0
    %v1450 = vand.u32 %v1438, 2147483648
    %v1451 = vsel %vm1449, %v1450, %v1448
    %v1452 = vrsqrt.pop %v1439
    %v1453 = vmul.f32 %v1452, %v1439
    %v1454 = vmul.f32 %v1453, %v1452
    %v1455 = vmul.f32 0.5, %v1454
    %v1456 = vsub.f32 1.5, %v1455
    %v1457 = vmul.f32 %v1452, %v1456
    %v1458 = vmul.f32 %v1439, %v1457
    %vm1459 = vcmp.eq.f32.partialorder %v1439, inf
    %v1460 = vsel %vm1459, %v1439, %v1458
    %vm1461 = vcmp.eq.f32.partialorder %v1439, 0.0
    %v1462 = vand.u32 %v1439, 2147483648
    %v1463 = vsel %vm1461, %v1462, %v1460
    %v1464 = vadd.f32 %v1451, 1e-06
    %v1465 = vadd.f32 %v1463, 1e-06
    %v1466 = vrcp.pop %v1464
    %v1467 = vmul.f32 %v1464, %v1466
    %v1468 = vsub.f32 1.0, %v1467
    %v1469 = vmul.f32 %v1466, %v1468
    %v1470 = vadd.f32 %v1466, %v1469
    %vm1471 = vweird.f32 %v1464
    %vm1472 = vweird.f32 %v1466
    %vm1473 = vmor %vm1471, %vm1472
    %v1474 = vsel %vm1473, %v1466, %v1470
    %v1475 = vand.u32 2147483647, %v1464
    %vm1476 = vcmp.eq.f32.partialorder %v1475, 8.507059e+37
    %v1477 = vand.u32 %v1464, 2147483648
    %v1478 = vor.u32 1.1754944e-38, %v1477
    %v1479 = vsel %vm1476, %v1478, %v1474
    %v1480 = vrcp.pop %v1465
    %v1481 = vmul.f32 %v1465, %v1480
    %v1482 = vsub.f32 1.0, %v1481
    %v1483 = vmul.f32 %v1480, %v1482
    %v1484 = vadd.f32 %v1480, %v1483
    %vm1485 = vweird.f32 %v1465
    %vm1486 = vweird.f32 %v1480
    %vm1487 = vmor %vm1485, %vm1486
    %v1488 = vsel %vm1487, %v1480, %v1484
    %v1489 = vand.u32 2147483647, %v1465
    %vm1490 = vcmp.eq.f32.partialorder %v1489, 8.507059e+37
    %v1491 = vand.u32 %v1465, 2147483648
    %v1492 = vor.u32 1.1754944e-38, %v1491
    %v1493 = vsel %vm1490, %v1492, %v1488
    %v1495 = vperm.slane %v1418, 0
    %v1497 = vmul.f32 %v1495, %v1428
    %v1498 = vmul.f32 %v1495, %v1429
    %v1499 = vmul.f32 %v1497, %v1479
    %v1500 = vmul.f32 %v1498, %v1493
    %v1502 = vperm.slane %v1419, 0
    %v1504 = vadd.f32 %v1499, %v1502
    %v1505 = vadd.f32 %v1500, %v1502
    %v1506 = vadd.f32 %v1504, %v111
    %v1507 = vadd.f32 %v1505, %v112
    %v1508 = vld [vmem:[%s13] sm:$0x1]
    %v1510 = vperm.slane %v1508, 0
    %v1512 = vmul.f32 %v1506, %v1510
    %v1513 = vmul.f32 %v1507, %v1510
    %v1514 = vsel %vm115, %v1512, 0.0
    %1515 = vadd.xlane.f32.xlu0 %v1514
    %v1516 = vpop.xlane.xlu0 %1515
    %v1517 = vsel %vm115, %v1513, 0.0
    %1518 = vadd.xlane.f32.xlu0 %v1517
    %v1519 = vpop.xlane.xlu0 %1518
    %v1520 = vld [vmem:[#allocation3] sm:$0x1]
    %v1522 = vperm.slane %v1520, 0
    %v1524 = vadd.f32 %v1516, %v1522
    %v1525 = vadd.f32 %v1519, %v1522
    %vm1526 = vcmask 7168
    %1527 = vst.msk [vmem:[%s15] sm:$0xff] %vm1526, %v1524
    %1528 = vst.msk [vmem:[%s15 + $0x8] sm:$0xff] %vm1526, %v1525
    // Predicated region
    $region70: #{tpu_custom_call.1} parent=1 // pred_check
      _
    $region71: #{tpu_custom_call.1} parent=1 // pred_check_branch
      %1530 = sbr.rel (0) target = $region73
    $region72: #{tpu_custom_call.1} parent=1 // pred_region
      _
    $region73: #{tpu_custom_call.1} parent=1 // pred_fallthru
      _
    // Predicated region
    $region74: #{tpu_custom_call.1} parent=1 // pred_check
      _
    $region75: #{tpu_custom_call.1} parent=1 // pred_check_branch
      %1532 = sbr.rel (0) target = $region77
    $region76: #{tpu_custom_call.1} parent=1 // pred_region
      %1534 = vsyncadd [#allocation6], 0
      %s1535 = sshll.u32 [#allocation9], 4
      %s1536 = int_to_ptr.vmem [resolvable:$true] %s1535
      %s1537 = sshll.u32 %s16, 4
      %s1538 = int_to_ptr.hbm [resolvable:$true] %s1537
      %1543 = dma.vmem_to_hbm [thread:$0]  %s1536, 64, %s1538, [#allocation6], 32, 32, 2
    $region77: #{tpu_custom_call.1} parent=1 // pred_fallthru
      _
    // Predicated region
    $region78: #{tpu_custom_call.1} parent=1 // pred_check
      _
    $region79: #{tpu_custom_call.1} parent=1 // pred_check_branch
      %1545 = sbr.rel (0) target = $region81
    $region80: #{tpu_custom_call.1} parent=1 // pred_region
      %1547 = vsyncadd [#allocation11], 0
      %s1548 = sshll.u32 [#allocation10], 4
      %s1549 = int_to_ptr.vmem [resolvable:$true] %s1548
      %s1550 = sshll.u32 %s17, 4
      %s1551 = int_to_ptr.hbm [resolvable:$true] %s1550
      %1556 = dma.vmem_to_hbm [thread:$0]  %s1549, 64, %s1551, [#allocation11], 32, 32, 2
    $region81: #{tpu_custom_call.1} parent=1 // pred_fallthru
      _
    // Predicated region
    $region82: #{tpu_custom_call.1} parent=1 // pred_check
      _
    $region83: #{tpu_custom_call.1} parent=1 // pred_check_branch
      %1558 = sbr.rel (0) target = $region85
    $region84: #{tpu_custom_call.1} parent=1 // pred_region
      _
    $region85: #{tpu_custom_call.1} parent=1 // pred_fallthru
      _
    // Predicated region
    $region86: #{tpu_custom_call.1} parent=1 // pred_check
      _
    $region87: #{tpu_custom_call.1} parent=1 // pred_check_branch
      %1560 = sbr.rel (0) target = $region89
    $region88: #{tpu_custom_call.1} parent=1 // pred_region
      %1562 = dma.done [#allocation6], 64
    $region89: #{tpu_custom_call.1} parent=1 // pred_fallthru
      _
    // Predicated region
    $region90: #{tpu_custom_call.1} parent=1 // pred_check
      _
    $region91: #{tpu_custom_call.1} parent=1 // pred_check_branch
      %1564 = sbr.rel (0) target = $region93
    $region92: #{tpu_custom_call.1} parent=1 // pred_region
      %1566 = dma.done [#allocation11], 64
    $region93: #{tpu_custom_call.1} parent=1 // pred_fallthru
      _
    %1567 = vsyncpa [#allocation5], 1
    %1568 = vsyncpa [#allocation8], 1
    %1569 = vsyncpa [#allocation6], 1
    %1570 = vsyncpa [#allocation11], 1

</llo_original>
